<compile_context>
chip_gen: v7x
topology: tpu7x:2x2x1
jax: 0.10.0
libtpu: 0.0.40
codegen_flags: <defaults>
</compile_context>

<pallas_src>
import functools

import jax
import jax.numpy as jnp
from jax.experimental import pallas as pl
from jax.experimental.pallas import tpu as pltpu

BN_EPS = 1e-5


def _round_up(x, m):
    return ((x + m - 1) // m) * m


# --------------------------------------------------------------------------
# Kernel (feature-major: features on sublanes, batch on lanes)
# --------------------------------------------------------------------------
def ncf_mlp_kernel(x_ref, w1_ref, wstack_ref, wf_ref, b_ref, out_ref, *,
                   n_fc_layers):
    """One batch tile of the NCF MLP, computed transposed.

    x_ref:      (F0, TILE_B)  packed [user; item] embedding tile.
    w1_ref:     (LANE, F0)    first Linear, transposed (VMEM-resident).
    wstack_ref: (max(n_fc-1,1), LANE, LANE) BN-folded hidden Linears, transposed.
    wf_ref:     (8, LANE)     BN-folded final Linear, transposed (row 0 real).
    b_ref:      (n_fc+1, LANE, 1) BN-folded biases as f32 column vectors.
    out_ref:    (1, TILE_B)   lane-dense logits for this batch tile.
    """
    # Layer 1: one dot with K = 2E (concat already eliminated by packing).
    x = jnp.dot(w1_ref[...], x_ref[...], preferred_element_type=jnp.float32)
    x = jnp.maximum(x + b_ref[0], 0.0)                      # (LANE, TILE_B) f32

    # Hidden layers 2..n_fc: x = relu(W'_k^T @ x + b'_k)  (BN already folded).
    for k in range(n_fc_layers - 1):
        w = wstack_ref[k]                                   # static index
        x = jnp.dot(w, x.astype(w.dtype), preferred_element_type=jnp.float32)
        x = jnp.maximum(x + b_ref[k + 1], 0.0)

    # Final scoring layer (last BN folded in; no activation).  Only row 0 of
    # wf is real -> only one lane-dense logit row is written back.
    y = jnp.dot(wf_ref[...], x.astype(wf_ref.dtype),
                preferred_element_type=jnp.float32)         # (8, TILE_B)
    out_ref[...] = (y[0:1, :] + b_ref[n_fc_layers][0:1, :]).astype(out_ref.dtype)
    # Dropout -> identity in inference mode.


# --------------------------------------------------------------------------
# Host-side parameter prep: BN folding + transpose + pad + pack.
# --------------------------------------------------------------------------
def prepare_kernel_params(params, compute_dtype=jnp.bfloat16):
    fc = params["fc"]
    E = params["user_emb"].shape[1]
    n_fc = len(fc)

    # Fold BN_k (eval affine: a*x + c) forward into Linear_{k+1} / final (f32).
    Ws = [fc[0][0]]                     # first Linear has no preceding BN
    bs = [fc[0][1]]
    for k in range(1, n_fc + 1):
        if k < n_fc:
            W, b = fc[k][0], fc[k][1]
        else:
            W, b = params["final_W"], params["final_b"]
        g, beta, mu, var = fc[k - 1][2:6]
        a = g / jnp.sqrt(var + BN_EPS)
        c = beta - a * mu
        Ws.append(a[:, None] * W)
        bs.append(c @ W + b)

    # Common padded hidden width (features live on sublanes; 128 keeps every
    # layer matmul a full (128,128)@(128,TILE_B) MXU shape).
    lane = _round_up(max(W.shape[1] for W in Ws[:-1]), 128)
    f0 = _round_up(2 * E, 16)           # packed-embedding feature dim (bf16 sublanes)

    def pad_t(W, rows, cols):           # W: (in, out) -> transposed + zero-padded
        Wt = W.T
        return jnp.pad(Wt, ((0, rows - Wt.shape[0]), (0, cols - Wt.shape[1])))

    w1T = pad_t(Ws[0], lane, f0).astype(compute_dtype)                # (lane, f0)
    if n_fc >= 2:
        wstackT = jnp.stack([pad_t(W, lane, lane) for W in Ws[1:-1]])
    else:
        wstackT = jnp.zeros((1, lane, lane), jnp.float32)             # unused dummy
    wstackT = wstackT.astype(compute_dtype)                           # (n_fc-1, lane, lane)
    wfT = pad_t(Ws[-1], 8, lane).astype(compute_dtype)                # (8, lane)

    bstack = jnp.stack(
        [jnp.pad(b, (0, lane - b.shape[0]))[:, None] for b in bs]
    ).astype(jnp.float32)                                             # (n_fc+1, lane, 1)

    return dict(w1T=w1T, wstackT=wstackT, wfT=wfT, bstack=bstack,
                lane=lane, f0=f0, n_fc=n_fc, emb_dim=E)


# --------------------------------------------------------------------------
# Forward wrapper
# --------------------------------------------------------------------------
def ncf_forward(params, user_input, item_input, *, tile_b=2048,
                compute_dtype=jnp.bfloat16):
    kp = prepare_kernel_params(params, compute_dtype)
    E, lane, f0, n_fc = kp["emb_dim"], kp["lane"], kp["f0"], kp["n_fc"]
    B = user_input.shape[0]

    # ---- batch tiling (batch lives on lanes -> multiples of 256 are safe) ----
    TILE_B = max(256, min(_round_up(tile_b, 256), 4096))
    B_ru = _round_up(B, 256)
    if B_ru >= 512:
        # Keep >= 2 grid steps so v7x megacore can split the ("parallel",) axis.
        TILE_B = min(TILE_B, _round_up(pl.cdiv(B_ru, 2), 256))
    TILE_B = min(TILE_B, B_ru)
    B_pad = _round_up(B, TILE_B)
    grid = B_pad // TILE_B

    # ---- gather + pack (glue): pad only the tiny int32 index vectors so the
    # gather directly produces the padded stream (no full-stream jnp.pad). ----
    # TODO(synk): for small tables, fuse the gather in-kernel (scalar-prefetch
    #             index tiles + VMEM-resident tables) to skip this HBM round trip.
    pad_n = B_pad - B
    ui = jnp.pad(user_input, (0, pad_n)) if pad_n else user_input
    ii = jnp.pad(item_input, (0, pad_n)) if pad_n else item_input
    u_t = params["user_emb"][ui].astype(compute_dtype).T              # (E, B_pad)
    i_t = params["item_emb"][ii].astype(compute_dtype).T              # (E, B_pad)
    x = jnp.concatenate([u_t, i_t], axis=0)                           # (2E, B_pad)
    if f0 != 2 * E:
        x = jnp.pad(x, ((0, f0 - 2 * E), (0, 0)))

    n_hidden = max(n_fc - 1, 1)
    kernel = functools.partial(ncf_mlp_kernel, n_fc_layers=n_fc)

    out = pl.pallas_call(
        kernel,
        out_shape=jax.ShapeDtypeStruct((1, B_pad), jnp.float32),
        grid_spec=pltpu.PrefetchScalarGridSpec(
            num_scalar_prefetch=0,
            grid=(grid,),
            in_specs=[
                pl.BlockSpec((f0, TILE_B), lambda b: (0, b)),             # packed emb tile
                pl.BlockSpec((lane, f0), lambda b: (0, 0)),               # W1^T (resident)
                pl.BlockSpec((n_hidden, lane, lane), lambda b: (0, 0, 0)),# hidden W^T stack
                pl.BlockSpec((8, lane), lambda b: (0, 0)),                # final W^T
                pl.BlockSpec((n_fc + 1, lane, 1), lambda b: (0, 0, 0)),   # bias stack
            ],
            out_specs=pl.BlockSpec((1, TILE_B), lambda b: (0, b)),        # lane-dense logits
        ),
        compiler_params=pltpu.CompilerParams(
            dimension_semantics=("parallel",),        # megacore sharding on v7x
            vmem_limit_bytes=32 * 1024 * 1024,
        ),
    )(x, kp["w1T"], kp["wstackT"], kp["wfT"], kp["bstack"])

    # torch: output.squeeze(); row 0 holds the real logits (contiguous slice).
    return jnp.squeeze(out[0, :B])


# --------------------------------------------------------------------------
# Parameter init + pure-JAX reference
# --------------------------------------------------------------------------
def make_ncf_params(key, num_users, num_items, embedding_dim, layers):
    params = {}
    k_u, k_i, key = jax.random.split(key, 3)
    params["user_emb"] = jax.random.normal(k_u, (num_users, embedding_dim), jnp.float32)
    params["item_emb"] = jax.random.normal(k_i, (num_items, embedding_dim), jnp.float32)

    fc = []
    prev = embedding_dim * 2
    for out_dim in layers:
        k_w, k_b, k_g, k_be, k_m, k_v, key = jax.random.split(key, 7)
        bound = 1.0 / (prev ** 0.5)
        W = jax.random.uniform(k_w, (prev, out_dim), jnp.float32, -bound, bound)
        b = jax.random.uniform(k_b, (out_dim,), jnp.float32, -bound, bound)
        # Non-trivial BN stats so the host-side BN folding is actually exercised.
        gamma = jax.random.uniform(k_g, (out_dim,), jnp.float32, 0.5, 1.5)
        beta = 0.1 * jax.random.normal(k_be, (out_dim,), jnp.float32)
        mean = 0.1 * jax.random.normal(k_m, (out_dim,), jnp.float32)
        var = jax.random.uniform(k_v, (out_dim,), jnp.float32, 0.5, 1.5)
        fc.append((W, b, gamma, beta, mean, var))
        prev = out_dim
    params["fc"] = fc

    k_w, k_b, key = jax.random.split(key, 3)
    bound = 1.0 / (prev ** 0.5)
    params["final_W"] = jax.random.uniform(k_w, (prev, 1), jnp.float32, -bound, bound)
    params["final_b"] = jax.random.uniform(k_b, (1,), jnp.float32, -bound, bound)
    return params


def ncf_reference(params, user_input, item_input):
    """Pure-JAX reference matching the PyTorch module (eval mode)."""
    u = params["user_emb"][user_input]
    i = params["item_emb"][item_input]
    x = jnp.concatenate([u, i], axis=1)
    for (W, b, g, beta, mu, var) in params["fc"]:
        x = x @ W + b                                       # Linear
        x = jnp.maximum(x, 0.0)                             # ReLU
        x = g * (x - mu) / jnp.sqrt(var + BN_EPS) + beta    # BatchNorm1d (eval)
        # Dropout -> identity in eval mode
    out = x @ params["final_W"] + params["final_b"]
    return jnp.squeeze(out)


if __name__ == "__main__":
    num_users, num_items = 64, 96
    embedding_dim = 16
    layers = [64, 32, 16, 8]
    B = 700  # not a multiple of the tile -> exercises tail padding + 2-step grid

    key = jax.random.PRNGKey(0)
    k_params, k_u, k_i = jax.random.split(key, 3)

    params = make_ncf_params(k_params, num_users, num_items, embedding_dim, layers)
    user_input = jax.random.randint(k_u, (B,), 0, num_users, dtype=jnp.int32)
    item_input = jax.random.randint(k_i, (B,), 0, num_items, dtype=jnp.int32)

    ref = ncf_reference(params, user_input, item_input)

    # Default bf16 MXU path (halved HBM traffic), 2-step parallel grid.
    out_bf16 = jax.block_until_ready(ncf_forward(params, user_input, item_input))
    assert out_bf16.shape == (B,), out_bf16.shape
    assert jnp.allclose(out_bf16, ref, atol=1e-1, rtol=1e-1), (out_bf16, ref)

    # f32 path with a small batch tile -> multi-step pipelined grid, exact check.
    out_f32 = jax.block_until_ready(
        ncf_forward(params, user_input, item_input, tile_b=256,
                    compute_dtype=jnp.float32))
    assert out_f32.shape == (B,), out_f32.shape
    assert jnp.allclose(out_f32, ref, atol=1e-4, rtol=1e-4), (out_f32, ref)

    print("KERNEL_OK")
</pallas_src>

<mosaic_0001>
module attributes {stable_mosaic.version = 11 : i64} {
  func.func @ncf_mlp_kernel(%arg0: i32, %arg1: memref<32x512xbf16, #tpu.memory_space<vmem>>, %arg2: memref<128x32xbf16, #tpu.memory_space<vmem>>, %arg3: memref<3x128x128xbf16, #tpu.memory_space<vmem>>, %arg4: memref<8x128xbf16, #tpu.memory_space<vmem>>, %arg5: memref<5x128x1xf32, #tpu.memory_space<vmem>>, %arg6: memref<1x512xf32, #tpu.memory_space<vmem>>) attributes {dimension_semantics = [#tpu.dimension_semantics<parallel>], iteration_bounds = array<i64: 2>, scalar_prefetch = 0 : i64, scratch_operands = 0 : i64, tpu.core_type = #tpu.core_type<tc>, window_params = [{transform_indices = @transform_0, window_bounds = array<i64: 32, 512>}, {pipeline_mode = #tpu.pipeline_mode<synchronous>, transform_indices = @transform_1, window_bounds = array<i64: 128, 32>}, {pipeline_mode = #tpu.pipeline_mode<synchronous>, transform_indices = @transform_2, window_bounds = array<i64: 3, 128, 128>}, {pipeline_mode = #tpu.pipeline_mode<synchronous>, transform_indices = @transform_3, window_bounds = array<i64: 8, 128>}, {pipeline_mode = #tpu.pipeline_mode<synchronous>, transform_indices = @transform_4, window_bounds = array<i64: 5, 128, 1>}, {transform_indices = @transform_5, window_bounds = array<i64: 1, 512>}]} {
    %c0 = arith.constant 0 : index
    %c0_0 = arith.constant 0 : index
    %0 = vector.load %arg2[%c0, %c0_0] : memref<128x32xbf16, #tpu.memory_space<vmem>>, vector<128x32xbf16>
    %c0_1 = arith.constant 0 : index
    %c0_2 = arith.constant 0 : index
    %1 = vector.load %arg1[%c0_1, %c0_2] : memref<32x512xbf16, #tpu.memory_space<vmem>>, vector<32x512xbf16>
    %cst = arith.constant dense<0.000000e+00> : vector<128x512xf32>
    %2 = tpu.matmul %0, %1, %cst {dimension_numbers = #tpu.dot_dimension_numbers<[1], [0], [0], [1], [0, 0, 1, 1], [], []>} : vector<128x32xbf16>, vector<32x512xbf16>, vector<128x512xf32> -> vector<128x512xf32>
    %c0_3 = arith.constant 0 : index
    %c0_4 = arith.constant 0 : index
    %c0_5 = arith.constant 0 : index
    %3 = vector.load %arg5[%c0_3, %c0_4, %c0_5] : memref<5x128x1xf32, #tpu.memory_space<vmem>>, vector<1x128x1xf32>
    %4 = vector.shape_cast %3 : vector<1x128x1xf32> to vector<128x1xf32>
    %5 = vector.broadcast %4 : vector<128x1xf32> to vector<128x512xf32>
    %6 = arith.addf %2, %5 : vector<128x512xf32>
    %cst_6 = arith.constant 0.000000e+00 : f32
    %7 = vector.broadcast %cst_6 : f32 to vector<128x512xf32>
    %8 = arith.maximumf %6, %7 : vector<128x512xf32>
    %c0_7 = arith.constant 0 : index
    %c0_8 = arith.constant 0 : index
    %c0_9 = arith.constant 0 : index
    %9 = vector.load %arg3[%c0_7, %c0_8, %c0_9] : memref<3x128x128xbf16, #tpu.memory_space<vmem>>, vector<1x128x128xbf16>
    %10 = vector.shape_cast %9 : vector<1x128x128xbf16> to vector<128x128xbf16>
    %11 = arith.truncf %8 : vector<128x512xf32> to vector<128x512xbf16>
    %cst_10 = arith.constant dense<0.000000e+00> : vector<128x512xf32>
    %12 = tpu.matmul %10, %11, %cst_10 {dimension_numbers = #tpu.dot_dimension_numbers<[1], [0], [0], [1], [0, 0, 1, 1], [], []>} : vector<128x128xbf16>, vector<128x512xbf16>, vector<128x512xf32> -> vector<128x512xf32>
    %c1 = arith.constant 1 : index
    %c0_11 = arith.constant 0 : index
    %c0_12 = arith.constant 0 : index
    %13 = vector.load %arg5[%c1, %c0_11, %c0_12] : memref<5x128x1xf32, #tpu.memory_space<vmem>>, vector<1x128x1xf32>
    %14 = vector.shape_cast %13 : vector<1x128x1xf32> to vector<128x1xf32>
    %15 = vector.broadcast %14 : vector<128x1xf32> to vector<128x512xf32>
    %16 = arith.addf %12, %15 : vector<128x512xf32>
    %cst_13 = arith.constant 0.000000e+00 : f32
    %17 = vector.broadcast %cst_13 : f32 to vector<128x512xf32>
    %18 = arith.maximumf %16, %17 : vector<128x512xf32>
    %c1_14 = arith.constant 1 : index
    %c0_15 = arith.constant 0 : index
    %c0_16 = arith.constant 0 : index
    %19 = vector.load %arg3[%c1_14, %c0_15, %c0_16] : memref<3x128x128xbf16, #tpu.memory_space<vmem>>, vector<1x128x128xbf16>
    %20 = vector.shape_cast %19 : vector<1x128x128xbf16> to vector<128x128xbf16>
    %21 = arith.truncf %18 : vector<128x512xf32> to vector<128x512xbf16>
    %cst_17 = arith.constant dense<0.000000e+00> : vector<128x512xf32>
    %22 = tpu.matmul %20, %21, %cst_17 {dimension_numbers = #tpu.dot_dimension_numbers<[1], [0], [0], [1], [0, 0, 1, 1], [], []>} : vector<128x128xbf16>, vector<128x512xbf16>, vector<128x512xf32> -> vector<128x512xf32>
    %c2 = arith.constant 2 : index
    %c0_18 = arith.constant 0 : index
    %c0_19 = arith.constant 0 : index
    %23 = vector.load %arg5[%c2, %c0_18, %c0_19] : memref<5x128x1xf32, #tpu.memory_space<vmem>>, vector<1x128x1xf32>
    %24 = vector.shape_cast %23 : vector<1x128x1xf32> to vector<128x1xf32>
    %25 = vector.broadcast %24 : vector<128x1xf32> to vector<128x512xf32>
    %26 = arith.addf %22, %25 : vector<128x512xf32>
    %cst_20 = arith.constant 0.000000e+00 : f32
    %27 = vector.broadcast %cst_20 : f32 to vector<128x512xf32>
    %28 = arith.maximumf %26, %27 : vector<128x512xf32>
    %c2_21 = arith.constant 2 : index
    %c0_22 = arith.constant 0 : index
    %c0_23 = arith.constant 0 : index
    %29 = vector.load %arg3[%c2_21, %c0_22, %c0_23] : memref<3x128x128xbf16, #tpu.memory_space<vmem>>, vector<1x128x128xbf16>
    %30 = vector.shape_cast %29 : vector<1x128x128xbf16> to vector<128x128xbf16>
    %31 = arith.truncf %28 : vector<128x512xf32> to vector<128x512xbf16>
    %cst_24 = arith.constant dense<0.000000e+00> : vector<128x512xf32>
    %32 = tpu.matmul %30, %31, %cst_24 {dimension_numbers = #tpu.dot_dimension_numbers<[1], [0], [0], [1], [0, 0, 1, 1], [], []>} : vector<128x128xbf16>, vector<128x512xbf16>, vector<128x512xf32> -> vector<128x512xf32>
    %c3 = arith.constant 3 : index
    %c0_25 = arith.constant 0 : index
    %c0_26 = arith.constant 0 : index
    %33 = vector.load %arg5[%c3, %c0_25, %c0_26] : memref<5x128x1xf32, #tpu.memory_space<vmem>>, vector<1x128x1xf32>
    %34 = vector.shape_cast %33 : vector<1x128x1xf32> to vector<128x1xf32>
    %35 = vector.broadcast %34 : vector<128x1xf32> to vector<128x512xf32>
    %36 = arith.addf %32, %35 : vector<128x512xf32>
    %cst_27 = arith.constant 0.000000e+00 : f32
    %37 = vector.broadcast %cst_27 : f32 to vector<128x512xf32>
    %38 = arith.maximumf %36, %37 : vector<128x512xf32>
    %c0_28 = arith.constant 0 : index
    %c0_29 = arith.constant 0 : index
    %39 = vector.load %arg4[%c0_28, %c0_29] : memref<8x128xbf16, #tpu.memory_space<vmem>>, vector<8x128xbf16>
    %40 = arith.truncf %38 : vector<128x512xf32> to vector<128x512xbf16>
    %cst_30 = arith.constant dense<0.000000e+00> : vector<8x512xf32>
    %41 = tpu.matmul %39, %40, %cst_30 {dimension_numbers = #tpu.dot_dimension_numbers<[1], [0], [0], [1], [0, 0, 1, 1], [], []>} : vector<8x128xbf16>, vector<128x512xbf16>, vector<8x512xf32> -> vector<8x512xf32>
    %42 = vector.extract_strided_slice %41 {offsets = [0, 0], sizes = [1, 512], strides = [1, 1]} : vector<8x512xf32> to vector<1x512xf32>
    %c4 = arith.constant 4 : index
    %c0_31 = arith.constant 0 : index
    %c0_32 = arith.constant 0 : index
    %43 = vector.load %arg5[%c4, %c0_31, %c0_32] : memref<5x128x1xf32, #tpu.memory_space<vmem>>, vector<1x128x1xf32>
    %44 = vector.shape_cast %43 : vector<1x128x1xf32> to vector<128x1xf32>
    %45 = vector.extract_strided_slice %44 {offsets = [0, 0], sizes = [1, 1], strides = [1, 1]} : vector<128x1xf32> to vector<1x1xf32>
    %46 = vector.broadcast %45 : vector<1x1xf32> to vector<1x512xf32>
    %47 = arith.addf %42, %46 : vector<1x512xf32>
    %c0_33 = arith.constant 0 : index
    %c0_34 = arith.constant 0 : index
    %48 = vector.load %arg6[%c0_33, %c0_34] : memref<1x512xf32, #tpu.memory_space<vmem>>, vector<1x512xf32>
    tpu.vector_store %arg6[%c0_33, %c0_34], %47 {strides = array<i32>} : memref<1x512xf32, #tpu.memory_space<vmem>>, vector<1x512xf32>,
    return
  }
  func.func @transform_0(%arg0: i32) -> (i32, i32) {
    %c0_i32 = arith.constant 0 : i32
    %c0_i32_0 = arith.constant 0 : i32
    return %c0_i32, %arg0 : i32, i32
  }
  func.func @transform_1(%arg0: i32) -> (i32, i32) {
    %c0_i32 = arith.constant 0 : i32
    %c0_i32_0 = arith.constant 0 : i32
    %c0_i32_1 = arith.constant 0 : i32
    return %c0_i32, %c0_i32_0 : i32, i32
  }
  func.func @transform_2(%arg0: i32) -> (i32, i32, i32) {
    %c0_i32 = arith.constant 0 : i32
    %c0_i32_0 = arith.constant 0 : i32
    %c0_i32_1 = arith.constant 0 : i32
    %c0_i32_2 = arith.constant 0 : i32
    return %c0_i32, %c0_i32_0, %c0_i32_1 : i32, i32, i32
  }
  func.func @transform_3(%arg0: i32) -> (i32, i32) {
    %c0_i32 = arith.constant 0 : i32
    %c0_i32_0 = arith.constant 0 : i32
    %c0_i32_1 = arith.constant 0 : i32
    return %c0_i32, %c0_i32_0 : i32, i32
  }
  func.func @transform_4(%arg0: i32) -> (i32, i32, i32) {
    %c0_i32 = arith.constant 0 : i32
    %c0_i32_0 = arith.constant 0 : i32
    %c0_i32_1 = arith.constant 0 : i32
    %c0_i32_2 = arith.constant 0 : i32
    return %c0_i32, %c0_i32_0, %c0_i32_1 : i32, i32, i32
  }
  func.func @transform_5(%arg0: i32) -> (i32, i32) {
    %c0_i32 = arith.constant 0 : i32
    %c0_i32_0 = arith.constant 0 : i32
    return %c0_i32, %arg0 : i32, i32
  }
}

</mosaic_0001>

<llo_original>
// kernel: tpu_custom_call.1
$region0: #{tpu_custom_call.1}
  #allocation0 [shape = 'u32[]', space=smem, size = 0x4, offset = 0x4, fixed_abs, tag = 'smem constant byte address 0x4 - core index']
  #allocation1 [shape = 'u32[144,128]{1,0:T(1,128)}', space=vmem, size = 0x12000, scoped, tag = 'internal scratch']
  %s0 = inlined_call_operand.vmem [shape: bf16[32,1024], index: 0, kind: input, shape index: {}]
  %s1 = inlined_call_operand.vmem [shape: bf16[128,32], index: 1, kind: input, shape index: {}]
  %s2 = inlined_call_operand.vmem [shape: bf16[3,128,128], index: 2, kind: input, shape index: {}]
  %s3 = inlined_call_operand.vmem [shape: bf16[8,128], index: 3, kind: input, shape index: {}]
  %s4 = inlined_call_operand.vmem [shape: f32[5,128,1], index: 4, kind: input, shape index: {}]
  %s5 = inlined_call_operand.hbm [shape: f32[1,1024], index: 5, kind: output, shape index: {}]
  %s6 = sld [smem:[#allocation0]]
  $region76: #{tpu_custom_call.1} parent=0
    _
  %s8 = ssub.s32 1, %s6
  %s9 = scalar_select 0, %s8, %s6
  $region1: #{tpu_custom_call.1} parent=0
    #allocation2 [shape = 'u8[65536]{0}', space=vmem, size = 0x10000, scoped, tag = 'input window, operand 0']
    #allocation3 [shape = 'u8[4096]{0}', space=vmem, size = 0x1000, scoped, tag = 'output window, operand 0']
    #allocation4 [shape = 's32[2]{0}', space=sflag, size = 0x8, scoped, tag = 'scoped memory for tpu_custom_call.1']
    %10 = vsyncpa [#allocation4], 0
    %s11 = scalar_lea.sflag [#allocation4], 1
    %12 = vsyncpa %s11, 0
    loop: start=0, step=1, limit=4
    $region2: #{tpu_custom_call.1} parent=1 // loop_pre_header
      _
    $region3: #{tpu_custom_call.1} parent=1 // loop_header
      %s14 = sphi 0, %s18
      %p15 = scmp.ge.s32.totalorder %s14, 4
      %s24 = sphi 0, %s26
      %s27 = sphi 0, %s24
      %s28 = sphi 0, %s27
      %s44 = sphi 0, %s28
      %s48 = sphi 0, %s48
      %s50 = sphi 0, %s48
      %s51 = sphi 0, %s50
      %s65 = sphi 0, %s51
      %s69 = sphi 0, %s69
      %s71 = sphi 0, %s69
      %s72 = sphi 0, %s71
      %s86 = sphi 0, %s72
      %s90 = sphi 0, %s90
      %s92 = sphi 0, %s90
      %s93 = sphi 0, %s92
      %s107 = sphi 0, %s93
      %s111 = sphi 0, %s111
      %s113 = sphi 0, %s111
      %s114 = sphi 0, %s113
      %s128 = sphi 0, %s114
      %s134 = sphi 0, %s136
      %s137 = sphi 0, %s134
      %s138 = sphi 0, %s137
      %s154 = sphi 0, %s138
    $region4: #{tpu_custom_call.1} parent=1 // loop_header_branch
      %17 = sbr.rel (%p15) target = $region8
    $region5: #{tpu_custom_call.1} parent=1 // loop_body
      %s19 = ssub.s32 %s14, 1
      %s20 = ssub.s32 %s14, 2
      %s21 = sadd.s32 %s14, 1
      %s22 = ssub.s32 %s14, %s21
      %p23 = scmp.eq.s32.totalorder %s22, 0
      %s25 = sadd.s32 %s24, 1
      %s26 = scalar_select %p23, %s24, %s25
      %p29 = pneg %p23
      %p30 = scmp.eq.s32.totalorder %s14, 1
      %p31 = por %p29, %p30
      %p32 = scmp.ne.s32.totalorder %s24, %s27
      %p33 = scmp.eq.s32.totalorder %s14, 0
      %p34 = por %p32, %p33
      %p35 = scmp.ne.s32.totalorder %s24, %s27
      %p36 = scmp.eq.s32.totalorder %s19, 1
      %p37 = por %p35, %p36
      %p38 = scmp.ne.s32.totalorder %s27, %s28
      %p39 = scmp.eq.s32.totalorder %s19, 0
      %p40 = por %p38, %p39
      %p41 = scmp.ne.s32.totalorder %s27, %s28
      %p42 = scmp.eq.s32.totalorder %s20, 1
      %p43 = por %p41, %p42
      %p45 = scmp.ne.s32.totalorder %s28, %s44
      %p46 = scmp.eq.s32.totalorder %s20, 0
      %p47 = por %p45, %p46
      %s49 = sadd.s32 %s48, 1
      %p52 = scmp.eq.s32.totalorder %s14, 1
      %p53 = scmp.ne.s32.totalorder %s48, %s50
      %p54 = scmp.eq.s32.totalorder %s14, 0
      %p55 = por %p53, %p54
      %p56 = scmp.ne.s32.totalorder %s48, %s50
      %p57 = scmp.eq.s32.totalorder %s19, 1
      %p58 = por %p56, %p57
      %p59 = scmp.ne.s32.totalorder %s50, %s51
      %p60 = scmp.eq.s32.totalorder %s19, 0
      %p61 = por %p59, %p60
      %p62 = scmp.ne.s32.totalorder %s50, %s51
      %p63 = scmp.eq.s32.totalorder %s20, 1
      %p64 = por %p62, %p63
      %p66 = scmp.ne.s32.totalorder %s51, %s65
      %p67 = scmp.eq.s32.totalorder %s20, 0
      %p68 = por %p66, %p67
      %s70 = sadd.s32 %s69, 1
      %p73 = scmp.eq.s32.totalorder %s14, 1
      %p74 = scmp.ne.s32.totalorder %s69, %s71
      %p75 = scmp.eq.s32.totalorder %s14, 0
      %p76 = por %p74, %p75
      %p77 = scmp.ne.s32.totalorder %s69, %s71
      %p78 = scmp.eq.s32.totalorder %s19, 1
      %p79 = por %p77, %p78
      %p80 = scmp.ne.s32.totalorder %s71, %s72
      %p81 = scmp.eq.s32.totalorder %s19, 0
      %p82 = por %p80, %p81
      %p83 = scmp.ne.s32.totalorder %s71, %s72
      %p84 = scmp.eq.s32.totalorder %s20, 1
      %p85 = por %p83, %p84
      %p87 = scmp.ne.s32.totalorder %s72, %s86
      %p88 = scmp.eq.s32.totalorder %s20, 0
      %p89 = por %p87, %p88
      %s91 = sadd.s32 %s90, 1
      %p94 = scmp.eq.s32.totalorder %s14, 1
      %p95 = scmp.ne.s32.totalorder %s90, %s92
      %p96 = scmp.eq.s32.totalorder %s14, 0
      %p97 = por %p95, %p96
      %p98 = scmp.ne.s32.totalorder %s90, %s92
      %p99 = scmp.eq.s32.totalorder %s19, 1
      %p100 = por %p98, %p99
      %p101 = scmp.ne.s32.totalorder %s92, %s93
      %p102 = scmp.eq.s32.totalorder %s19, 0
      %p103 = por %p101, %p102
      %p104 = scmp.ne.s32.totalorder %s92, %s93
      %p105 = scmp.eq.s32.totalorder %s20, 1
      %p106 = por %p104, %p105
      %p108 = scmp.ne.s32.totalorder %s93, %s107
      %p109 = scmp.eq.s32.totalorder %s20, 0
      %p110 = por %p108, %p109
      %s112 = sadd.s32 %s111, 1
      %p115 = scmp.eq.s32.totalorder %s14, 1
      %p116 = scmp.ne.s32.totalorder %s111, %s113
      %p117 = scmp.eq.s32.totalorder %s14, 0
      %p118 = por %p116, %p117
      %p119 = scmp.ne.s32.totalorder %s111, %s113
      %p120 = scmp.eq.s32.totalorder %s19, 1
      %p121 = por %p119, %p120
      %p122 = scmp.ne.s32.totalorder %s113, %s114
      %p123 = scmp.eq.s32.totalorder %s19, 0
      %p124 = por %p122, %p123
      %p125 = scmp.ne.s32.totalorder %s113, %s114
      %p126 = scmp.eq.s32.totalorder %s20, 1
      %p127 = por %p125, %p126
      %p129 = scmp.ne.s32.totalorder %s114, %s128
      %p130 = scmp.eq.s32.totalorder %s20, 0
      %p131 = por %p129, %p130
      %s132 = ssub.s32 %s14, %s21
      %p133 = scmp.eq.s32.totalorder %s132, 0
      %s135 = sadd.s32 %s134, 1
      %s136 = scalar_select %p133, %s134, %s135
      %p139 = pneg %p133
      %p140 = scmp.eq.s32.totalorder %s14, 1
      %p141 = por %p139, %p140
      %p142 = scmp.ne.s32.totalorder %s134, %s137
      %p143 = scmp.eq.s32.totalorder %s14, 0
      %p144 = por %p142, %p143
      %p145 = scmp.ne.s32.totalorder %s134, %s137
      %p146 = scmp.eq.s32.totalorder %s19, 1
      %p147 = por %p145, %p146
      %p148 = scmp.ne.s32.totalorder %s137, %s138
      %p149 = scmp.eq.s32.totalorder %s19, 0
      %p150 = por %p148, %p149
      %p151 = scmp.ne.s32.totalorder %s137, %s138
      %p152 = scmp.eq.s32.totalorder %s20, 1
      %p153 = por %p151, %p152
      %p155 = scmp.ne.s32.totalorder %s138, %s154
      %p156 = scmp.eq.s32.totalorder %s20, 0
      %p157 = por %p155, %p156
      %p158 = scmp.le.s32.totalorder 1, %s14
      %p159 = scmp.lt.s32.totalorder %s14, 3
      %p160 = pnand %p158, %p159
      %p161 = pneg %p160
      // Predicated region
      $region9: #{tpu_custom_call.1} parent=5 // pred_check
        _
      $region10: #{tpu_custom_call.1} parent=5 // pred_check_branch
        %163 = sbr.rel (%p160) target = $region12
      $region11: #{tpu_custom_call.1} parent=5 // pred_region
        %s164 = ssub.s32 %s14, 1
        // Predicated region
        $region13: #{tpu_custom_call.1} parent=11 // pred_check
          %p165 = pneg %p61
        $region14: #{tpu_custom_call.1} parent=11 // pred_check_branch
          %167 = sbr.rel (%p165) target = $region16
        $region15: #{tpu_custom_call.1} parent=11 // pred_region
          _
        $region16: #{tpu_custom_call.1} parent=11 // pred_fallthru
          _
        // Predicated region
        $region17: #{tpu_custom_call.1} parent=11 // pred_check
          %p168 = pneg %p82
        $region18: #{tpu_custom_call.1} parent=11 // pred_check_branch
          %170 = sbr.rel (%p168) target = $region20
        $region19: #{tpu_custom_call.1} parent=11 // pred_region
          _
        $region20: #{tpu_custom_call.1} parent=11 // pred_fallthru
          _
        // Predicated region
        $region21: #{tpu_custom_call.1} parent=11 // pred_check
          %p171 = pneg %p103
        $region22: #{tpu_custom_call.1} parent=11 // pred_check_branch
          %173 = sbr.rel (%p171) target = $region24
        $region23: #{tpu_custom_call.1} parent=11 // pred_region
          _
        $region24: #{tpu_custom_call.1} parent=11 // pred_fallthru
          _
        // Predicated region
        $region25: #{tpu_custom_call.1} parent=11 // pred_check
          %p174 = pneg %p124
        $region26: #{tpu_custom_call.1} parent=11 // pred_check_branch
          %176 = sbr.rel (%p174) target = $region28
        $region27: #{tpu_custom_call.1} parent=11 // pred_region
          _
        $region28: #{tpu_custom_call.1} parent=11 // pred_fallthru
          _
      $region12: #{tpu_custom_call.1} parent=5 // pred_fallthru
        _
      %p177 = scmp.lt.s32.totalorder %s14, 2
      // Predicated region
      $region29: #{tpu_custom_call.1} parent=5 // pred_check
        %p178 = pneg %p177
      $region30: #{tpu_custom_call.1} parent=5 // pred_check_branch
        %180 = sbr.rel (%p178) target = $region32
      $region31: #{tpu_custom_call.1} parent=5 // pred_region
        // Predicated region
        $region33: #{tpu_custom_call.1} parent=31 // pred_check
          %p181 = pneg %p34
        $region34: #{tpu_custom_call.1} parent=31 // pred_check_branch
          %183 = sbr.rel (%p181) target = $region36
        $region35: #{tpu_custom_call.1} parent=31 // pred_region
          %s184 = sand.u32 %s24, 1
          %s185 = sand.u32 %s24, 1
          %s186 = smul.addr %s185, 64
          %s187 = scalar_lea.vmem [#allocation2], %s186
          %s188 = smul.u32 4, %s14
          %s189 = smul.addr %s188, 4
          %s190 = scalar_lea.vmem %s0, %s189
          // Predicated region
          $region37: #{tpu_custom_call.1} parent=35 // pred_check
            _
          $region38: #{tpu_custom_call.1} parent=35 // pred_check_branch
            %192 = sbr.rel (0) target = $region40
          $region39: #{tpu_custom_call.1} parent=35 // pred_region
            // Predicated region
            $region41: #{tpu_custom_call.1} parent=39 // pred_check
              _
            $region42: #{tpu_custom_call.1} parent=39 // pred_check_branch
              %194 = sbr.rel (0) target = $region44
            $region43: #{tpu_custom_call.1} parent=39 // pred_region
              loop: start=0, step=1, limit=1
              $region45: #{tpu_custom_call.1} parent=43 // loop_pre_header
                _
              $region46: #{tpu_custom_call.1} parent=43 // loop_header
                %s196 = sphi 0, %s200
                %p197 = scmp.ge.s32.totalorder %s196, 1
                %s201 = sphi %s190, %s190
                %s202 = sphi %s187, %s187
              $region47: #{tpu_custom_call.1} parent=43 // loop_header_branch
                %199 = sbr.rel (%p197) target = $region51
              $region48: #{tpu_custom_call.1} parent=43 // loop_body
                %v203 = vld [vmem:[%s201] sm:$0xff]
                %204 = vst [vmem:[%s202] sm:$0xff] %v203
                %v205 = vld [vmem:[%s201 + $0x8] sm:$0xff]
                %206 = vst [vmem:[%s202 + $0x8] sm:$0xff] %v205
                %v207 = vld [vmem:[%s201 + $0x20] sm:$0xff]
                %208 = vst [vmem:[%s202 + $0x10] sm:$0xff] %v207
                %v209 = vld [vmem:[%s201 + $0x28] sm:$0xff]
                %210 = vst [vmem:[%s202 + $0x18] sm:$0xff] %v209
                %v211 = vld [vmem:[%s201 + $0x40] sm:$0xff]
                %212 = vst [vmem:[%s202 + $0x20] sm:$0xff] %v211
                %v213 = vld [vmem:[%s201 + $0x48] sm:$0xff]
                %214 = vst [vmem:[%s202 + $0x28] sm:$0xff] %v213
                %v215 = vld [vmem:[%s201 + $0x60] sm:$0xff]
                %216 = vst [vmem:[%s202 + $0x30] sm:$0xff] %v215
                %v217 = vld [vmem:[%s201 + $0x68] sm:$0xff]
                %218 = vst [vmem:[%s202 + $0x38] sm:$0xff] %v217
              $region49: #{tpu_custom_call.1} parent=43 // loop_footer
                %s200 = sadd.s32 1, %s196
              $region50: #{tpu_custom_call.1} parent=43 // loop_footer_branch
                %195 = sbr.rel target = $region46
              $region51: #{tpu_custom_call.1} parent=43 // loop_exit
                _
            $region44: #{tpu_custom_call.1} parent=39 // pred_fallthru
              _
            // Predicated region
            $region52: #{tpu_custom_call.1} parent=39 // pred_check
              _
            $region53: #{tpu_custom_call.1} parent=39 // pred_check_branch
              %220 = sbr.rel target = $region55
            $region54: #{tpu_custom_call.1} parent=39 // pred_region
              _
            $region55: #{tpu_custom_call.1} parent=39 // pred_fallthru
              _
          $region40: #{tpu_custom_call.1} parent=35 // pred_fallthru
            _
          %221 = vnop
        $region36: #{tpu_custom_call.1} parent=31 // pred_fallthru
          _
      $region32: #{tpu_custom_call.1} parent=5 // pred_fallthru
        _
      %p222 = scmp.le.s32.totalorder 1, %s14
      %p223 = scmp.lt.s32.totalorder %s14, 3
      %p224 = pnand %p222, %p223
      %p225 = pneg %p224
      // Predicated region
      $region56: #{tpu_custom_call.1} parent=5 // pred_check
        _
      $region57: #{tpu_custom_call.1} parent=5 // pred_check_branch
        %227 = sbr.rel (%p224) target = $region59
      $region58: #{tpu_custom_call.1} parent=5 // pred_region
        %s228 = ssub.s32 %s14, 1
        %s229 = sand.u32 %s27, 1
        %s230 = sand.u32 %s27, 1
        %s231 = smul.addr %s230, 64
        %s232 = scalar_lea.vmem [#allocation2], %s231
        // Predicated region
        $region60: #{tpu_custom_call.1} parent=58 // pred_check
          %p233 = pneg %p40
        $region61: #{tpu_custom_call.1} parent=58 // pred_check_branch
          %235 = sbr.rel (%p233) target = $region63
        $region62: #{tpu_custom_call.1} parent=58 // pred_region
          _
        $region63: #{tpu_custom_call.1} parent=58 // pred_fallthru
          _
        %s236 = sand.u32 %s27, 1
        %s237 = sand.u32 %s27, 1
        %s238 = smul.addr %s237, 64
        %s239 = scalar_lea.vmem [#allocation2], %s238
        %p240 = pneg %p40
        %p241 = pneg %p37
        %p242 = pneg %p61
        %p243 = pneg %p58
        %p244 = pneg %p82
        %p245 = pneg %p79
        %p246 = pneg %p103
        %p247 = pneg %p100
        %p248 = pneg %p124
        %p249 = pneg %p121
        %p250 = pneg %p150
        %p251 = pneg %p147
        %s252 = sand.u32 %s137, 1
        %s253 = scalar_lea.sflag [#allocation4], %s252
        %s254 = sand.u32 %s137, 1
        %s255 = smul.addr %s254, 4
        %s256 = scalar_lea.vmem [#allocation3], %s255
        %s257 = smul.u32 4, %s19
        %s258 = smul.u32 4, %s19
        %v260 = vld [vmem:[%s1] sm:$0xf]
        %v261 = vld [vmem:[%s1 + $0x4] sm:$0xf]
        %v262 = vld [vmem:[%s1 + $0x8] sm:$0xf]
        %v263 = vld [vmem:[%s1 + $0xc] sm:$0xf]
        %v264 = vld [vmem:[%s1 + $0x10] sm:$0xf]
        %v265 = vld [vmem:[%s1 + $0x14] sm:$0xf]
        %v266 = vld [vmem:[%s1 + $0x18] sm:$0xf]
        %v267 = vld [vmem:[%s1 + $0x1c] sm:$0xf]
        %v268 = vld [vmem:[%s1 + $0x20] sm:$0xf]
        %v269 = vld [vmem:[%s1 + $0x24] sm:$0xf]
        %v270 = vld [vmem:[%s1 + $0x28] sm:$0xf]
        %v271 = vld [vmem:[%s1 + $0x2c] sm:$0xf]
        %v272 = vld [vmem:[%s1 + $0x30] sm:$0xf]
        %v273 = vld [vmem:[%s1 + $0x34] sm:$0xf]
        %v274 = vld [vmem:[%s1 + $0x38] sm:$0xf]
        %v275 = vld [vmem:[%s1 + $0x3c] sm:$0xf]
        %v276 = vld [vmem:[%s232] sm:$0xff]
        %v277 = vld [vmem:[%s232 + $0x8] sm:$0xff]
        %v278 = vld [vmem:[%s232 + $0x10] sm:$0xff]
        %v279 = vld [vmem:[%s232 + $0x18] sm:$0xff]
        %v280 = vld [vmem:[%s232 + $0x20] sm:$0xff]
        %v281 = vld [vmem:[%s232 + $0x28] sm:$0xff]
        %v282 = vld [vmem:[%s232 + $0x30] sm:$0xff]
        %v283 = vld [vmem:[%s232 + $0x38] sm:$0xff]
        %v284 = vld [vmem:[%s4] sm:$0xff]
        %v285 = vld [vmem:[%s4 + $0x8] sm:$0xff]
        %v286 = vld [vmem:[%s4 + $0x10] sm:$0xff]
        %v287 = vld [vmem:[%s4 + $0x18] sm:$0xff]
        %v288 = vld [vmem:[%s4 + $0x20] sm:$0xff]
        %v289 = vld [vmem:[%s4 + $0x28] sm:$0xff]
        %v290 = vld [vmem:[%s4 + $0x30] sm:$0xff]
        %v291 = vld [vmem:[%s4 + $0x38] sm:$0xff]
        %v292 = vld [vmem:[%s4 + $0x40] sm:$0xff]
        %v293 = vld [vmem:[%s4 + $0x48] sm:$0xff]
        %v294 = vld [vmem:[%s4 + $0x50] sm:$0xff]
        %v295 = vld [vmem:[%s4 + $0x58] sm:$0xff]
        %v296 = vld [vmem:[%s4 + $0x60] sm:$0xff]
        %v297 = vld [vmem:[%s4 + $0x68] sm:$0xff]
        %v298 = vld [vmem:[%s4 + $0x70] sm:$0xff]
        %v299 = vld [vmem:[%s4 + $0x78] sm:$0xff]
        %301 = vset.pattern.permute.xlu0 0
        %302 = vperm.xlu0 %301, %v284
        %v303 = vpop.permute.xlu0 %302
        %306 = vset.pattern.permute.xlu0 0
        %307 = vperm.xlu0 %306, %v285
        %v308 = vpop.permute.xlu0 %307
        %311 = vset.pattern.permute.xlu0 0
        %312 = vperm.xlu0 %311, %v286
        %v313 = vpop.permute.xlu0 %312
        %316 = vset.pattern.permute.xlu0 0
        %317 = vperm.xlu0 %316, %v287
        %v318 = vpop.permute.xlu0 %317
        %321 = vset.pattern.permute.xlu0 0
        %322 = vperm.xlu0 %321, %v288
        %v323 = vpop.permute.xlu0 %322
        %326 = vset.pattern.permute.xlu0 0
        %327 = vperm.xlu0 %326, %v289
        %v328 = vpop.permute.xlu0 %327
        %331 = vset.pattern.permute.xlu0 0
        %332 = vperm.xlu0 %331, %v290
        %v333 = vpop.permute.xlu0 %332
        %336 = vset.pattern.permute.xlu0 0
        %337 = vperm.xlu0 %336, %v291
        %v338 = vpop.permute.xlu0 %337
        %341 = vset.pattern.permute.xlu0 0
        %342 = vperm.xlu0 %341, %v292
        %v343 = vpop.permute.xlu0 %342
        %346 = vset.pattern.permute.xlu0 0
        %347 = vperm.xlu0 %346, %v293
        %v348 = vpop.permute.xlu0 %347
        %351 = vset.pattern.permute.xlu0 0
        %352 = vperm.xlu0 %351, %v294
        %v353 = vpop.permute.xlu0 %352
        %356 = vset.pattern.permute.xlu0 0
        %357 = vperm.xlu0 %356, %v295
        %v358 = vpop.permute.xlu0 %357
        %361 = vset.pattern.permute.xlu0 0
        %362 = vperm.xlu0 %361, %v296
        %v363 = vpop.permute.xlu0 %362
        %366 = vset.pattern.permute.xlu0 0
        %367 = vperm.xlu0 %366, %v297
        %v368 = vpop.permute.xlu0 %367
        %371 = vset.pattern.permute.xlu0 0
        %372 = vperm.xlu0 %371, %v298
        %v373 = vpop.permute.xlu0 %372
        %376 = vset.pattern.permute.xlu0 0
        %377 = vperm.xlu0 %376, %v299
        %v378 = vpop.permute.xlu0 %377
        %v396 = vunpack.c.l.b16 %v260
        %v397 = vunpack.c.l.b16 %v261
        %v398 = vunpack.c.l.b16 %v262
        %v399 = vunpack.c.l.b16 %v263
        %v400 = vunpack.c.l.b16 %v264
        %v401 = vunpack.c.l.b16 %v265
        %v402 = vunpack.c.l.b16 %v266
        %v403 = vunpack.c.l.b16 %v267
        %v404 = vunpack.c.l.b16 %v268
        %v405 = vunpack.c.l.b16 %v269
        %v406 = vunpack.c.l.b16 %v270
        %v407 = vunpack.c.l.b16 %v271
        %v408 = vunpack.c.l.b16 %v272
        %v409 = vunpack.c.l.b16 %v273
        %v410 = vunpack.c.l.b16 %v274
        %v411 = vunpack.c.l.b16 %v275
        %v412 = vpack.c.b16 %v397, %v396
        %v413 = vpack.c.b16 %v399, %v398
        %v414 = vpack.c.b16 %v401, %v400
        %v415 = vpack.c.b16 %v403, %v402
        %v416 = vpack.c.b16 %v405, %v404
        %v417 = vpack.c.b16 %v407, %v406
        %v418 = vpack.c.b16 %v409, %v408
        %v419 = vpack.c.b16 %v411, %v410
        %v428 = vunpack.c.l.b16 %v276
        %v429 = vunpack.c.h.b16 %v276
        %v430 = vunpack.c.l.b16 %v277
        %v431 = vunpack.c.h.b16 %v277
        %v432 = vunpack.c.l.b16 %v278
        %v433 = vunpack.c.h.b16 %v278
        %v434 = vunpack.c.l.b16 %v279
        %v435 = vunpack.c.h.b16 %v279
        %v436 = vunpack.c.l.b16 %v280
        %v437 = vunpack.c.h.b16 %v280
        %v438 = vunpack.c.l.b16 %v281
        %v439 = vunpack.c.h.b16 %v281
        %v440 = vunpack.c.l.b16 %v282
        %v441 = vunpack.c.h.b16 %v282
        %v442 = vunpack.c.l.b16 %v283
        %v443 = vunpack.c.h.b16 %v283
        %v444 = vpack.c.b16 %v432, %v428
        %v445 = vpack.c.b16 %v433, %v429
        %v446 = vpack.c.b16 %v434, %v430
        %v447 = vpack.c.b16 %v435, %v431
        %v448 = vpack.c.b16 %v440, %v436
        %v449 = vpack.c.b16 %v441, %v437
        %v450 = vpack.c.b16 %v442, %v438
        %v451 = vpack.c.b16 %v443, %v439
        %vm460 = vcmask 261120
        %v462 = vsel %vm460, %v412, 0
        %v465 = vsel %vm460, %v413, 0
        %v468 = vsel %vm460, %v414, 0
        %v471 = vsel %vm460, %v415, 0
        %v474 = vsel %vm460, %v416, 0
        %v477 = vsel %vm460, %v417, 0
        %v480 = vsel %vm460, %v418, 0
        %v483 = vsel %vm460, %v419, 0
        %485 = vmatprep.subr.bf16.mxu0 %v445
        %486 = vmatpush1.bf16.msra.mxu0 %v444
        %487 = vmatprep.subr.bf16.mxu0 %v449
        %488 = vmatpush1.bf16.msra.mxu0 %v448
        %489 = vmatprep.subr.bf16.mxu0 0
        %490 = vmatpush1.bf16.msra.mxu0 0
        %491 = vmatprep.subr.bf16.mxu0 0
        %492 = vmatpush1.bf16.msra.mxu0 0
        %493 = vmatprep.subr.bf16.mxu0 0
        %494 = vmatpush1.bf16.msra.mxu0 0
        %495 = vmatprep.subr.bf16.mxu0 0
        %496 = vmatpush1.bf16.msra.mxu0 0
        %497 = vmatprep.subr.bf16.mxu0 0
        %498 = vmatpush1.bf16.msra.mxu0 0
        %499 = vmatprep.subr.bf16.mxu0 0
        %500 = vmatpush1.bf16.msra.mxu0 0
        %501 = vmatprep.subr.bf16.mxu0 0
        %502 = vmatpush1.bf16.msra.mxu0 0
        %503 = vmatprep.subr.bf16.mxu0 0
        %504 = vmatpush1.bf16.msra.mxu0 0
        %505 = vmatprep.subr.bf16.mxu0 0
        %506 = vmatpush1.bf16.msra.mxu0 0
        %507 = vmatprep.subr.bf16.mxu0 0
        %508 = vmatpush1.bf16.msra.mxu0 0
        %509 = vmatprep.subr.bf16.mxu0 0
        %510 = vmatpush1.bf16.msra.mxu0 0
        %511 = vmatprep.subr.bf16.mxu0 0
        %512 = vmatpush1.bf16.msra.mxu0 0
        %513 = vmatprep.subr.bf16.mxu0 0
        %514 = vmatpush1.bf16.msra.mxu0 0
        %515 = vmatprep.subr.bf16.mxu0 0
        %516 = vmatpush1.bf16.msra.mxu0 0
        %517 = vmatprep.mubr.bf16.mxu0 0
        %518 = vmatmul.mubr.bf16.gmra.mrb[0].mxu0 %v462
        %v519 = vpop.f32.mrb[0].mxu0
        %v520 = vadd.f32 %v303, %v519
        %v521 = vpop.f32.mrb[0].mxu0
        %v522 = vadd.f32 %v303, %v521
        %v523 = vpop.f32.mrb[0].mxu0
        %v524 = vadd.f32 %v308, %v523
        %v525 = vpop.f32.mrb[0].mxu0
        %v526 = vadd.f32 %v308, %v525
        %527 = vmatprep.mubr.bf16.mxu0 0
        %528 = vmatmul.mubr.bf16.gmra.mrb[0].mxu0 %v465
        %v529 = vpop.f32.mrb[0].mxu0
        %v530 = vadd.f32 %v313, %v529
        %v531 = vpop.f32.mrb[0].mxu0
        %v532 = vadd.f32 %v313, %v531
        %v533 = vpop.f32.mrb[0].mxu0
        %v534 = vadd.f32 %v318, %v533
        %v535 = vpop.f32.mrb[0].mxu0
        %v536 = vadd.f32 %v318, %v535
        %537 = vmatprep.mubr.bf16.mxu0 0
        %538 = vmatmul.mubr.bf16.gmra.mrb[0].mxu0 %v468
        %v539 = vpop.f32.mrb[0].mxu0
        %v540 = vadd.f32 %v323, %v539
        %v541 = vpop.f32.mrb[0].mxu0
        %v542 = vadd.f32 %v323, %v541
        %v543 = vpop.f32.mrb[0].mxu0
        %v544 = vadd.f32 %v328, %v543
        %v545 = vpop.f32.mrb[0].mxu0
        %v546 = vadd.f32 %v328, %v545
        %547 = vmatprep.mubr.bf16.mxu0 0
        %548 = vmatmul.mubr.bf16.gmra.mrb[0].mxu0 %v471
        %v549 = vpop.f32.mrb[0].mxu0
        %v550 = vadd.f32 %v333, %v549
        %v551 = vpop.f32.mrb[0].mxu0
        %v552 = vadd.f32 %v333, %v551
        %v553 = vpop.f32.mrb[0].mxu0
        %v554 = vadd.f32 %v338, %v553
        %v555 = vpop.f32.mrb[0].mxu0
        %v556 = vadd.f32 %v338, %v555
        %557 = vmatprep.mubr.bf16.mxu0 0
        %558 = vmatmul.mubr.bf16.gmra.mrb[0].mxu0 %v474
        %v559 = vpop.f32.mrb[0].mxu0
        %v560 = vadd.f32 %v343, %v559
        %v561 = vpop.f32.mrb[0].mxu0
        %v562 = vadd.f32 %v343, %v561
        %v563 = vpop.f32.mrb[0].mxu0
        %v564 = vadd.f32 %v348, %v563
        %v565 = vpop.f32.mrb[0].mxu0
        %v566 = vadd.f32 %v348, %v565
        %567 = vmatprep.mubr.bf16.mxu0 0
        %568 = vmatmul.mubr.bf16.gmra.mrb[0].mxu0 %v477
        %v569 = vpop.f32.mrb[0].mxu0
        %v570 = vadd.f32 %v353, %v569
        %v571 = vpop.f32.mrb[0].mxu0
        %v572 = vadd.f32 %v353, %v571
        %v573 = vpop.f32.mrb[0].mxu0
        %v574 = vadd.f32 %v358, %v573
        %v575 = vpop.f32.mrb[0].mxu0
        %v576 = vadd.f32 %v358, %v575
        %577 = vmatprep.mubr.bf16.mxu0 0
        %578 = vmatmul.mubr.bf16.gmra.mrb[0].mxu0 %v480
        %v579 = vpop.f32.mrb[0].mxu0
        %v580 = vadd.f32 %v363, %v579
        %v581 = vpop.f32.mrb[0].mxu0
        %v582 = vadd.f32 %v363, %v581
        %v583 = vpop.f32.mrb[0].mxu0
        %v584 = vadd.f32 %v368, %v583
        %v585 = vpop.f32.mrb[0].mxu0
        %v586 = vadd.f32 %v368, %v585
        %587 = vmatprep.mubr.bf16.mxu0 0
        %588 = vmatmul.mubr.bf16.gmra.mrb[0].mxu0 %v483
        %v589 = vpop.f32.mrb[0].mxu0
        %v590 = vadd.f32 %v373, %v589
        %v591 = vpop.f32.mrb[0].mxu0
        %v592 = vadd.f32 %v373, %v591
        %v593 = vpop.f32.mrb[0].mxu0
        %v594 = vadd.f32 %v378, %v593
        %v595 = vpop.f32.mrb[0].mxu0
        %v596 = vadd.f32 %v378, %v595
        %597 = vdwg.mxu0
        %598 = vmatprep.subr.bf16.mxu0 %v447
        %599 = vmatpush1.bf16.msra.mxu0 %v446
        %600 = vmatprep.subr.bf16.mxu0 %v451
        %601 = vmatpush1.bf16.msra.mxu0 %v450
        %602 = vmatprep.subr.bf16.mxu0 0
        %603 = vmatpush1.bf16.msra.mxu0 0
        %604 = vmatprep.subr.bf16.mxu0 0
        %605 = vmatpush1.bf16.msra.mxu0 0
        %606 = vmatprep.subr.bf16.mxu0 0
        %607 = vmatpush1.bf16.msra.mxu0 0
        %608 = vmatprep.subr.bf16.mxu0 0
        %609 = vmatpush1.bf16.msra.mxu0 0
        %610 = vmatprep.subr.bf16.mxu0 0
        %611 = vmatpush1.bf16.msra.mxu0 0
        %612 = vmatprep.subr.bf16.mxu0 0
        %613 = vmatpush1.bf16.msra.mxu0 0
        %614 = vmatprep.subr.bf16.mxu0 0
        %615 = vmatpush1.bf16.msra.mxu0 0
        %616 = vmatprep.subr.bf16.mxu0 0
        %617 = vmatpush1.bf16.msra.mxu0 0
        %618 = vmatprep.subr.bf16.mxu0 0
        %619 = vmatpush1.bf16.msra.mxu0 0
        %620 = vmatprep.subr.bf16.mxu0 0
        %621 = vmatpush1.bf16.msra.mxu0 0
        %622 = vmatprep.subr.bf16.mxu0 0
        %623 = vmatpush1.bf16.msra.mxu0 0
        %624 = vmatprep.subr.bf16.mxu0 0
        %625 = vmatpush1.bf16.msra.mxu0 0
        %626 = vmatprep.subr.bf16.mxu0 0
        %627 = vmatpush1.bf16.msra.mxu0 0
        %628 = vmatprep.subr.bf16.mxu0 0
        %629 = vmatpush1.bf16.msra.mxu0 0
        %630 = vmatprep.mubr.bf16.mxu0 0
        %631 = vmatmul.mubr.bf16.gmra.mrb[0].mxu0 %v462
        %v632 = vpop.f32.mrb[0].mxu0
        %v633 = vadd.f32 %v303, %v632
        %v634 = vpop.f32.mrb[0].mxu0
        %v635 = vadd.f32 %v303, %v634
        %v636 = vpop.f32.mrb[0].mxu0
        %v637 = vadd.f32 %v308, %v636
        %v638 = vpop.f32.mrb[0].mxu0
        %v639 = vadd.f32 %v308, %v638
        %640 = vmatprep.mubr.bf16.mxu0 0
        %641 = vmatmul.mubr.bf16.gmra.mrb[0].mxu0 %v465
        %v642 = vpop.f32.mrb[0].mxu0
        %v643 = vadd.f32 %v313, %v642
        %v644 = vpop.f32.mrb[0].mxu0
        %v645 = vadd.f32 %v313, %v644
        %v646 = vpop.f32.mrb[0].mxu0
        %v647 = vadd.f32 %v318, %v646
        %v648 = vpop.f32.mrb[0].mxu0
        %v649 = vadd.f32 %v318, %v648
        %650 = vmatprep.mubr.bf16.mxu0 0
        %651 = vmatmul.mubr.bf16.gmra.mrb[0].mxu0 %v468
        %v652 = vpop.f32.mrb[0].mxu0
        %v653 = vadd.f32 %v323, %v652
        %v654 = vpop.f32.mrb[0].mxu0
        %v655 = vadd.f32 %v323, %v654
        %v656 = vpop.f32.mrb[0].mxu0
        %v657 = vadd.f32 %v328, %v656
        %v658 = vpop.f32.mrb[0].mxu0
        %v659 = vadd.f32 %v328, %v658
        %660 = vmatprep.mubr.bf16.mxu0 0
        %661 = vmatmul.mubr.bf16.gmra.mrb[0].mxu0 %v471
        %v662 = vpop.f32.mrb[0].mxu0
        %v663 = vadd.f32 %v333, %v662
        %v664 = vpop.f32.mrb[0].mxu0
        %v665 = vadd.f32 %v333, %v664
        %v666 = vpop.f32.mrb[0].mxu0
        %v667 = vadd.f32 %v338, %v666
        %v668 = vpop.f32.mrb[0].mxu0
        %v669 = vadd.f32 %v338, %v668
        %670 = vmatprep.mubr.bf16.mxu0 0
        %671 = vmatmul.mubr.bf16.gmra.mrb[0].mxu0 %v474
        %v672 = vpop.f32.mrb[0].mxu0
        %v673 = vadd.f32 %v343, %v672
        %v674 = vpop.f32.mrb[0].mxu0
        %v675 = vadd.f32 %v343, %v674
        %v676 = vpop.f32.mrb[0].mxu0
        %v677 = vadd.f32 %v348, %v676
        %v678 = vpop.f32.mrb[0].mxu0
        %v679 = vadd.f32 %v348, %v678
        %680 = vmatprep.mubr.bf16.mxu0 0
        %681 = vmatmul.mubr.bf16.gmra.mrb[0].mxu0 %v477
        %v682 = vpop.f32.mrb[0].mxu0
        %v683 = vadd.f32 %v353, %v682
        %v684 = vpop.f32.mrb[0].mxu0
        %v685 = vadd.f32 %v353, %v684
        %v686 = vpop.f32.mrb[0].mxu0
        %v687 = vadd.f32 %v358, %v686
        %v688 = vpop.f32.mrb[0].mxu0
        %v689 = vadd.f32 %v358, %v688
        %690 = vmatprep.mubr.bf16.mxu0 0
        %691 = vmatmul.mubr.bf16.gmra.mrb[0].mxu0 %v480
        %v692 = vpop.f32.mrb[0].mxu0
        %v693 = vadd.f32 %v363, %v692
        %v694 = vpop.f32.mrb[0].mxu0
        %v695 = vadd.f32 %v363, %v694
        %v696 = vpop.f32.mrb[0].mxu0
        %v697 = vadd.f32 %v368, %v696
        %v698 = vpop.f32.mrb[0].mxu0
        %v699 = vadd.f32 %v368, %v698
        %700 = vmatprep.mubr.bf16.mxu0 0
        %701 = vmatmul.mubr.bf16.gmra.mrb[0].mxu0 %v483
        %v702 = vpop.f32.mrb[0].mxu0
        %v703 = vadd.f32 %v373, %v702
        %v704 = vpop.f32.mrb[0].mxu0
        %v705 = vadd.f32 %v373, %v704
        %v706 = vpop.f32.mrb[0].mxu0
        %v707 = vadd.f32 %v378, %v706
        %v708 = vpop.f32.mrb[0].mxu0
        %v709 = vadd.f32 %v378, %v708
        %710 = vdwg.mxu0
        %v711 = vmax.f32 %v520, 0.0
        %v712 = vmax.f32 %v522, 0.0
        %v713 = vmax.f32 %v633, 0.0
        %v714 = vmax.f32 %v635, 0.0
        %v715 = vmax.f32 %v524, 0.0
        %v716 = vmax.f32 %v526, 0.0
        %v717 = vmax.f32 %v637, 0.0
        %v718 = vmax.f32 %v639, 0.0
        %v719 = vmax.f32 %v530, 0.0
        %v720 = vmax.f32 %v532, 0.0
        %v721 = vmax.f32 %v643, 0.0
        %v722 = vmax.f32 %v645, 0.0
        %v723 = vmax.f32 %v534, 0.0
        %v724 = vmax.f32 %v536, 0.0
        %v725 = vmax.f32 %v647, 0.0
        %v726 = vmax.f32 %v649, 0.0
        %v727 = vmax.f32 %v540, 0.0
        %v728 = vmax.f32 %v542, 0.0
        %v729 = vmax.f32 %v653, 0.0
        %v730 = vmax.f32 %v655, 0.0
        %v731 = vmax.f32 %v544, 0.0
        %v732 = vmax.f32 %v546, 0.0
        %v733 = vmax.f32 %v657, 0.0
        %v734 = vmax.f32 %v659, 0.0
        %v735 = vmax.f32 %v550, 0.0
        %v736 = vmax.f32 %v552, 0.0
        %v737 = vmax.f32 %v663, 0.0
        %v738 = vmax.f32 %v665, 0.0
        %v739 = vmax.f32 %v554, 0.0
        %v740 = vmax.f32 %v556, 0.0
        %v741 = vmax.f32 %v667, 0.0
        %v742 = vmax.f32 %v669, 0.0
        %v743 = vmax.f32 %v560, 0.0
        %v744 = vmax.f32 %v562, 0.0
        %v745 = vmax.f32 %v673, 0.0
        %v746 = vmax.f32 %v675, 0.0
        %v747 = vmax.f32 %v564, 0.0
        %v748 = vmax.f32 %v566, 0.0
        %v749 = vmax.f32 %v677, 0.0
        %v750 = vmax.f32 %v679, 0.0
        %v751 = vmax.f32 %v570, 0.0
        %v752 = vmax.f32 %v572, 0.0
        %v753 = vmax.f32 %v683, 0.0
        %v754 = vmax.f32 %v685, 0.0
        %v755 = vmax.f32 %v574, 0.0
        %v756 = vmax.f32 %v576, 0.0
        %v757 = vmax.f32 %v687, 0.0
        %v758 = vmax.f32 %v689, 0.0
        %v759 = vmax.f32 %v580, 0.0
        %v760 = vmax.f32 %v582, 0.0
        %v761 = vmax.f32 %v693, 0.0
        %v762 = vmax.f32 %v695, 0.0
        %v763 = vmax.f32 %v584, 0.0
        %v764 = vmax.f32 %v586, 0.0
        %v765 = vmax.f32 %v697, 0.0
        %v766 = vmax.f32 %v699, 0.0
        %v767 = vmax.f32 %v590, 0.0
        %v768 = vmax.f32 %v592, 0.0
        %v769 = vmax.f32 %v703, 0.0
        %v770 = vmax.f32 %v705, 0.0
        %v771 = vmax.f32 %v594, 0.0
        %v772 = vmax.f32 %v596, 0.0
        %v773 = vmax.f32 %v707, 0.0
        %v774 = vmax.f32 %v709, 0.0
        %v775 = vld [vmem:[%s2] sm:$0xf]
        %v776 = vld [vmem:[%s2 + $0x4] sm:$0xf]
        %v777 = vld [vmem:[%s2 + $0x8] sm:$0xf]
        %v778 = vld [vmem:[%s2 + $0xc] sm:$0xf]
        %v779 = vld [vmem:[%s2 + $0x10] sm:$0xf]
        %v780 = vld [vmem:[%s2 + $0x14] sm:$0xf]
        %v781 = vld [vmem:[%s2 + $0x18] sm:$0xf]
        %v782 = vld [vmem:[%s2 + $0x1c] sm:$0xf]
        %v783 = vld [vmem:[%s2 + $0x20] sm:$0xf]
        %v784 = vld [vmem:[%s2 + $0x24] sm:$0xf]
        %v785 = vld [vmem:[%s2 + $0x28] sm:$0xf]
        %v786 = vld [vmem:[%s2 + $0x2c] sm:$0xf]
        %v787 = vld [vmem:[%s2 + $0x30] sm:$0xf]
        %v788 = vld [vmem:[%s2 + $0x34] sm:$0xf]
        %v789 = vld [vmem:[%s2 + $0x38] sm:$0xf]
        %v790 = vld [vmem:[%s2 + $0x3c] sm:$0xf]
        %v791 = vpack.c.bf16 %v715, %v711
        %v792 = vpack.c.bf16 %v716, %v712
        %v793 = vpack.c.bf16 %v717, %v713
        %v794 = vpack.c.bf16 %v718, %v714
        %v795 = vpack.c.bf16 %v723, %v719
        %v796 = vpack.c.bf16 %v724, %v720
        %v797 = vpack.c.bf16 %v725, %v721
        %v798 = vpack.c.bf16 %v726, %v722
        %v799 = vpack.c.bf16 %v731, %v727
        %v800 = vpack.c.bf16 %v732, %v728
        %v801 = vpack.c.bf16 %v733, %v729
        %v802 = vpack.c.bf16 %v734, %v730
        %v803 = vpack.c.bf16 %v739, %v735
        %v804 = vpack.c.bf16 %v740, %v736
        %v805 = vpack.c.bf16 %v741, %v737
        %v806 = vpack.c.bf16 %v742, %v738
        %v807 = vpack.c.bf16 %v747, %v743
        %v808 = vpack.c.bf16 %v748, %v744
        %v809 = vpack.c.bf16 %v749, %v745
        %v810 = vpack.c.bf16 %v750, %v746
        %v811 = vpack.c.bf16 %v755, %v751
        %v812 = vpack.c.bf16 %v756, %v752
        %v813 = vpack.c.bf16 %v757, %v753
        %v814 = vpack.c.bf16 %v758, %v754
        %v815 = vpack.c.bf16 %v763, %v759
        %v816 = vpack.c.bf16 %v764, %v760
        %v817 = vpack.c.bf16 %v765, %v761
        %v818 = vpack.c.bf16 %v766, %v762
        %v819 = vpack.c.bf16 %v771, %v767
        %v820 = vpack.c.bf16 %v772, %v768
        %v821 = vpack.c.bf16 %v773, %v769
        %v822 = vpack.c.bf16 %v774, %v770
        %s823 = scalar_lea.vmem %s4, 128
        %v824 = vld [vmem:[%s823] sm:$0xff]
        %v825 = vld [vmem:[%s823 + $0x8] sm:$0xff]
        %v826 = vld [vmem:[%s823 + $0x10] sm:$0xff]
        %v827 = vld [vmem:[%s823 + $0x18] sm:$0xff]
        %v828 = vld [vmem:[%s823 + $0x20] sm:$0xff]
        %v829 = vld [vmem:[%s823 + $0x28] sm:$0xff]
        %v830 = vld [vmem:[%s823 + $0x30] sm:$0xff]
        %v831 = vld [vmem:[%s823 + $0x38] sm:$0xff]
        %v832 = vld [vmem:[%s823 + $0x40] sm:$0xff]
        %v833 = vld [vmem:[%s823 + $0x48] sm:$0xff]
        %v834 = vld [vmem:[%s823 + $0x50] sm:$0xff]
        %v835 = vld [vmem:[%s823 + $0x58] sm:$0xff]
        %v836 = vld [vmem:[%s823 + $0x60] sm:$0xff]
        %v837 = vld [vmem:[%s823 + $0x68] sm:$0xff]
        %v838 = vld [vmem:[%s823 + $0x70] sm:$0xff]
        %v839 = vld [vmem:[%s823 + $0x78] sm:$0xff]
        %841 = vset.pattern.permute.xlu0 0
        %842 = vperm.xlu0 %841, %v824
        %v843 = vpop.permute.xlu0 %842
        %846 = vset.pattern.permute.xlu0 0
        %847 = vperm.xlu0 %846, %v825
        %v848 = vpop.permute.xlu0 %847
        %851 = vset.pattern.permute.xlu0 0
        %852 = vperm.xlu0 %851, %v826
        %v853 = vpop.permute.xlu0 %852
        %856 = vset.pattern.permute.xlu0 0
        %857 = vperm.xlu0 %856, %v827
        %v858 = vpop.permute.xlu0 %857
        %861 = vset.pattern.permute.xlu0 0
        %862 = vperm.xlu0 %861, %v828
        %v863 = vpop.permute.xlu0 %862
        %866 = vset.pattern.permute.xlu0 0
        %867 = vperm.xlu0 %866, %v829
        %v868 = vpop.permute.xlu0 %867
        %871 = vset.pattern.permute.xlu0 0
        %872 = vperm.xlu0 %871, %v830
        %v873 = vpop.permute.xlu0 %872
        %876 = vset.pattern.permute.xlu0 0
        %877 = vperm.xlu0 %876, %v831
        %v878 = vpop.permute.xlu0 %877
        %881 = vset.pattern.permute.xlu0 0
        %882 = vperm.xlu0 %881, %v832
        %v883 = vpop.permute.xlu0 %882
        %886 = vset.pattern.permute.xlu0 0
        %887 = vperm.xlu0 %886, %v833
        %v888 = vpop.permute.xlu0 %887
        %891 = vset.pattern.permute.xlu0 0
        %892 = vperm.xlu0 %891, %v834
        %v893 = vpop.permute.xlu0 %892
        %896 = vset.pattern.permute.xlu0 0
        %897 = vperm.xlu0 %896, %v835
        %v898 = vpop.permute.xlu0 %897
        %901 = vset.pattern.permute.xlu0 0
        %902 = vperm.xlu0 %901, %v836
        %v903 = vpop.permute.xlu0 %902
        %906 = vset.pattern.permute.xlu0 0
        %907 = vperm.xlu0 %906, %v837
        %v908 = vpop.permute.xlu0 %907
        %911 = vset.pattern.permute.xlu0 0
        %912 = vperm.xlu0 %911, %v838
        %v913 = vpop.permute.xlu0 %912
        %916 = vset.pattern.permute.xlu0 0
        %917 = vperm.xlu0 %916, %v839
        %v918 = vpop.permute.xlu0 %917
        %v936 = vunpack.c.l.b16 %v775
        %v937 = vunpack.c.l.b16 %v776
        %v938 = vunpack.c.l.b16 %v777
        %v939 = vunpack.c.l.b16 %v778
        %v940 = vunpack.c.l.b16 %v779
        %v941 = vunpack.c.l.b16 %v780
        %v942 = vunpack.c.l.b16 %v781
        %v943 = vunpack.c.l.b16 %v782
        %v944 = vunpack.c.l.b16 %v783
        %v945 = vunpack.c.l.b16 %v784
        %v946 = vunpack.c.l.b16 %v785
        %v947 = vunpack.c.l.b16 %v786
        %v948 = vunpack.c.l.b16 %v787
        %v949 = vunpack.c.l.b16 %v788
        %v950 = vunpack.c.l.b16 %v789
        %v951 = vunpack.c.l.b16 %v790
        %v952 = vpack.c.b16 %v937, %v936
        %v953 = vpack.c.b16 %v939, %v938
        %v954 = vpack.c.b16 %v941, %v940
        %v955 = vpack.c.b16 %v943, %v942
        %v956 = vpack.c.b16 %v945, %v944
        %v957 = vpack.c.b16 %v947, %v946
        %v958 = vpack.c.b16 %v949, %v948
        %v959 = vpack.c.b16 %v951, %v950
        %968 = vmatprep.subr.bf16.mxu0 %v792
        %969 = vmatpush1.bf16.msra.mxu0 %v791
        %970 = vmatprep.subr.bf16.mxu0 %v796
        %971 = vmatpush1.bf16.msra.mxu0 %v795
        %972 = vmatprep.subr.bf16.mxu0 %v800
        %973 = vmatpush1.bf16.msra.mxu0 %v799
        %974 = vmatprep.subr.bf16.mxu0 %v804
        %975 = vmatpush1.bf16.msra.mxu0 %v803
        %976 = vmatprep.subr.bf16.mxu0 %v808
        %977 = vmatpush1.bf16.msra.mxu0 %v807
        %978 = vmatprep.subr.bf16.mxu0 %v812
        %979 = vmatpush1.bf16.msra.mxu0 %v811
        %980 = vmatprep.subr.bf16.mxu0 %v816
        %981 = vmatpush1.bf16.msra.mxu0 %v815
        %982 = vmatprep.subr.bf16.mxu0 %v820
        %983 = vmatpush1.bf16.msra.mxu0 %v819
        %984 = vmatprep.subr.bf16.mxu0 0
        %985 = vmatpush1.bf16.msra.mxu0 0
        %986 = vmatprep.subr.bf16.mxu0 0
        %987 = vmatpush1.bf16.msra.mxu0 0
        %988 = vmatprep.subr.bf16.mxu0 0
        %989 = vmatpush1.bf16.msra.mxu0 0
        %990 = vmatprep.subr.bf16.mxu0 0
        %991 = vmatpush1.bf16.msra.mxu0 0
        %992 = vmatprep.subr.bf16.mxu0 0
        %993 = vmatpush1.bf16.msra.mxu0 0
        %994 = vmatprep.subr.bf16.mxu0 0
        %995 = vmatpush1.bf16.msra.mxu0 0
        %996 = vmatprep.subr.bf16.mxu0 0
        %997 = vmatpush1.bf16.msra.mxu0 0
        %998 = vmatprep.subr.bf16.mxu0 0
        %999 = vmatpush1.bf16.msra.mxu0 0
        %1000 = vmatprep.mubr.bf16.mxu0 0
        %1001 = vmatmul.mubr.bf16.gmra.mrb[0].mxu0 %v952
        %v1002 = vpop.f32.mrb[0].mxu0
        %v1003 = vadd.f32 %v843, %v1002
        %v1004 = vpop.f32.mrb[0].mxu0
        %v1005 = vadd.f32 %v843, %v1004
        %v1006 = vpop.f32.mrb[0].mxu0
        %v1007 = vadd.f32 %v848, %v1006
        %v1008 = vpop.f32.mrb[0].mxu0
        %v1009 = vadd.f32 %v848, %v1008
        %1010 = vmatprep.mubr.bf16.mxu0 0
        %1011 = vmatmul.mubr.bf16.gmra.mrb[0].mxu0 %v953
        %v1012 = vpop.f32.mrb[0].mxu0
        %v1013 = vadd.f32 %v853, %v1012
        %v1014 = vpop.f32.mrb[0].mxu0
        %v1015 = vadd.f32 %v853, %v1014
        %v1016 = vpop.f32.mrb[0].mxu0
        %v1017 = vadd.f32 %v858, %v1016
        %v1018 = vpop.f32.mrb[0].mxu0
        %v1019 = vadd.f32 %v858, %v1018
        %1020 = vmatprep.mubr.bf16.mxu0 0
        %1021 = vmatmul.mubr.bf16.gmra.mrb[0].mxu0 %v954
        %v1022 = vpop.f32.mrb[0].mxu0
        %v1023 = vadd.f32 %v863, %v1022
        %v1024 = vpop.f32.mrb[0].mxu0
        %v1025 = vadd.f32 %v863, %v1024
        %v1026 = vpop.f32.mrb[0].mxu0
        %v1027 = vadd.f32 %v868, %v1026
        %v1028 = vpop.f32.mrb[0].mxu0
        %v1029 = vadd.f32 %v868, %v1028
        %1030 = vmatprep.mubr.bf16.mxu0 0
        %1031 = vmatmul.mubr.bf16.gmra.mrb[0].mxu0 %v955
        %v1032 = vpop.f32.mrb[0].mxu0
        %v1033 = vadd.f32 %v873, %v1032
        %v1034 = vpop.f32.mrb[0].mxu0
        %v1035 = vadd.f32 %v873, %v1034
        %v1036 = vpop.f32.mrb[0].mxu0
        %v1037 = vadd.f32 %v878, %v1036
        %v1038 = vpop.f32.mrb[0].mxu0
        %v1039 = vadd.f32 %v878, %v1038
        %1040 = vmatprep.mubr.bf16.mxu0 0
        %1041 = vmatmul.mubr.bf16.gmra.mrb[0].mxu0 %v956
        %v1042 = vpop.f32.mrb[0].mxu0
        %v1043 = vadd.f32 %v883, %v1042
        %v1044 = vpop.f32.mrb[0].mxu0
        %v1045 = vadd.f32 %v883, %v1044
        %v1046 = vpop.f32.mrb[0].mxu0
        %v1047 = vadd.f32 %v888, %v1046
        %v1048 = vpop.f32.mrb[0].mxu0
        %v1049 = vadd.f32 %v888, %v1048
        %1050 = vmatprep.mubr.bf16.mxu0 0
        %1051 = vmatmul.mubr.bf16.gmra.mrb[0].mxu0 %v957
        %v1052 = vpop.f32.mrb[0].mxu0
        %v1053 = vadd.f32 %v893, %v1052
        %v1054 = vpop.f32.mrb[0].mxu0
        %v1055 = vadd.f32 %v893, %v1054
        %v1056 = vpop.f32.mrb[0].mxu0
        %v1057 = vadd.f32 %v898, %v1056
        %v1058 = vpop.f32.mrb[0].mxu0
        %v1059 = vadd.f32 %v898, %v1058
        %1060 = vmatprep.mubr.bf16.mxu0 0
        %1061 = vmatmul.mubr.bf16.gmra.mrb[0].mxu0 %v958
        %v1062 = vpop.f32.mrb[0].mxu0
        %v1063 = vadd.f32 %v903, %v1062
        %v1064 = vpop.f32.mrb[0].mxu0
        %v1065 = vadd.f32 %v903, %v1064
        %v1066 = vpop.f32.mrb[0].mxu0
        %v1067 = vadd.f32 %v908, %v1066
        %v1068 = vpop.f32.mrb[0].mxu0
        %v1069 = vadd.f32 %v908, %v1068
        %1070 = vmatprep.mubr.bf16.mxu0 0
        %1071 = vmatmul.mubr.bf16.gmra.mrb[0].mxu0 %v959
        %v1072 = vpop.f32.mrb[0].mxu0
        %v1073 = vadd.f32 %v913, %v1072
        %v1074 = vpop.f32.mrb[0].mxu0
        %v1075 = vadd.f32 %v913, %v1074
        %v1076 = vpop.f32.mrb[0].mxu0
        %v1077 = vadd.f32 %v918, %v1076
        %v1078 = vpop.f32.mrb[0].mxu0
        %v1079 = vadd.f32 %v918, %v1078
        %1080 = vdwg.mxu0
        %1081 = vmatprep.subr.bf16.mxu0 %v794
        %1082 = vmatpush1.bf16.msra.mxu0 %v793
        %1083 = vmatprep.subr.bf16.mxu0 %v798
        %1084 = vmatpush1.bf16.msra.mxu0 %v797
        %1085 = vmatprep.subr.bf16.mxu0 %v802
        %1086 = vmatpush1.bf16.msra.mxu0 %v801
        %1087 = vmatprep.subr.bf16.mxu0 %v806
        %1088 = vmatpush1.bf16.msra.mxu0 %v805
        %1089 = vmatprep.subr.bf16.mxu0 %v810
        %1090 = vmatpush1.bf16.msra.mxu0 %v809
        %1091 = vmatprep.subr.bf16.mxu0 %v814
        %1092 = vmatpush1.bf16.msra.mxu0 %v813
        %1093 = vmatprep.subr.bf16.mxu0 %v818
        %1094 = vmatpush1.bf16.msra.mxu0 %v817
        %1095 = vmatprep.subr.bf16.mxu0 %v822
        %1096 = vmatpush1.bf16.msra.mxu0 %v821
        %1097 = vmatprep.subr.bf16.mxu0 0
        %1098 = vmatpush1.bf16.msra.mxu0 0
        %1099 = vmatprep.subr.bf16.mxu0 0
        %1100 = vmatpush1.bf16.msra.mxu0 0
        %1101 = vmatprep.subr.bf16.mxu0 0
        %1102 = vmatpush1.bf16.msra.mxu0 0
        %1103 = vmatprep.subr.bf16.mxu0 0
        %1104 = vmatpush1.bf16.msra.mxu0 0
        %1105 = vmatprep.subr.bf16.mxu0 0
        %1106 = vmatpush1.bf16.msra.mxu0 0
        %1107 = vmatprep.subr.bf16.mxu0 0
        %1108 = vmatpush1.bf16.msra.mxu0 0
        %1109 = vmatprep.subr.bf16.mxu0 0
        %1110 = vmatpush1.bf16.msra.mxu0 0
        %1111 = vmatprep.subr.bf16.mxu0 0
        %1112 = vmatpush1.bf16.msra.mxu0 0
        %1113 = vmatprep.mubr.bf16.mxu0 0
        %1114 = vmatmul.mubr.bf16.gmra.mrb[0].mxu0 %v952
        %v1115 = vpop.f32.mrb[0].mxu0
        %v1116 = vadd.f32 %v843, %v1115
        %v1117 = vpop.f32.mrb[0].mxu0
        %v1118 = vadd.f32 %v843, %v1117
        %v1119 = vpop.f32.mrb[0].mxu0
        %v1120 = vadd.f32 %v848, %v1119
        %v1121 = vpop.f32.mrb[0].mxu0
        %v1122 = vadd.f32 %v848, %v1121
        %1123 = vmatprep.mubr.bf16.mxu0 0
        %1124 = vmatmul.mubr.bf16.gmra.mrb[0].mxu0 %v953
        %v1125 = vpop.f32.mrb[0].mxu0
        %v1126 = vadd.f32 %v853, %v1125
        %v1127 = vpop.f32.mrb[0].mxu0
        %v1128 = vadd.f32 %v853, %v1127
        %v1129 = vpop.f32.mrb[0].mxu0
        %v1130 = vadd.f32 %v858, %v1129
        %v1131 = vpop.f32.mrb[0].mxu0
        %v1132 = vadd.f32 %v858, %v1131
        %1133 = vmatprep.mubr.bf16.mxu0 0
        %1134 = vmatmul.mubr.bf16.gmra.mrb[0].mxu0 %v954
        %v1135 = vpop.f32.mrb[0].mxu0
        %v1136 = vadd.f32 %v863, %v1135
        %v1137 = vpop.f32.mrb[0].mxu0
        %v1138 = vadd.f32 %v863, %v1137
        %v1139 = vpop.f32.mrb[0].mxu0
        %v1140 = vadd.f32 %v868, %v1139
        %v1141 = vpop.f32.mrb[0].mxu0
        %v1142 = vadd.f32 %v868, %v1141
        %1143 = vmatprep.mubr.bf16.mxu0 0
        %1144 = vmatmul.mubr.bf16.gmra.mrb[0].mxu0 %v955
        %v1145 = vpop.f32.mrb[0].mxu0
        %v1146 = vadd.f32 %v873, %v1145
        %v1147 = vpop.f32.mrb[0].mxu0
        %v1148 = vadd.f32 %v873, %v1147
        %v1149 = vpop.f32.mrb[0].mxu0
        %v1150 = vadd.f32 %v878, %v1149
        %v1151 = vpop.f32.mrb[0].mxu0
        %v1152 = vadd.f32 %v878, %v1151
        %1153 = vmatprep.mubr.bf16.mxu0 0
        %1154 = vmatmul.mubr.bf16.gmra.mrb[0].mxu0 %v956
        %v1155 = vpop.f32.mrb[0].mxu0
        %v1156 = vadd.f32 %v883, %v1155
        %v1157 = vpop.f32.mrb[0].mxu0
        %v1158 = vadd.f32 %v883, %v1157
        %v1159 = vpop.f32.mrb[0].mxu0
        %v1160 = vadd.f32 %v888, %v1159
        %v1161 = vpop.f32.mrb[0].mxu0
        %v1162 = vadd.f32 %v888, %v1161
        %1163 = vmatprep.mubr.bf16.mxu0 0
        %1164 = vmatmul.mubr.bf16.gmra.mrb[0].mxu0 %v957
        %v1165 = vpop.f32.mrb[0].mxu0
        %v1166 = vadd.f32 %v893, %v1165
        %v1167 = vpop.f32.mrb[0].mxu0
        %v1168 = vadd.f32 %v893, %v1167
        %v1169 = vpop.f32.mrb[0].mxu0
        %v1170 = vadd.f32 %v898, %v1169
        %v1171 = vpop.f32.mrb[0].mxu0
        %v1172 = vadd.f32 %v898, %v1171
        %1173 = vmatprep.mubr.bf16.mxu0 0
        %1174 = vmatmul.mubr.bf16.gmra.mrb[0].mxu0 %v958
        %v1175 = vpop.f32.mrb[0].mxu0
        %v1176 = vadd.f32 %v903, %v1175
        %v1177 = vpop.f32.mrb[0].mxu0
        %v1178 = vadd.f32 %v903, %v1177
        %v1179 = vpop.f32.mrb[0].mxu0
        %v1180 = vadd.f32 %v908, %v1179
        %v1181 = vpop.f32.mrb[0].mxu0
        %v1182 = vadd.f32 %v908, %v1181
        %1183 = vmatprep.mubr.bf16.mxu0 0
        %1184 = vmatmul.mubr.bf16.gmra.mrb[0].mxu0 %v959
        %v1185 = vpop.f32.mrb[0].mxu0
        %v1186 = vadd.f32 %v913, %v1185
        %v1187 = vpop.f32.mrb[0].mxu0
        %v1188 = vadd.f32 %v913, %v1187
        %v1189 = vpop.f32.mrb[0].mxu0
        %v1190 = vadd.f32 %v918, %v1189
        %v1191 = vpop.f32.mrb[0].mxu0
        %v1192 = vadd.f32 %v918, %v1191
        %1193 = vdwg.mxu0
        %v1194 = vmax.f32 %v1003, 0.0
        %v1195 = vmax.f32 %v1005, 0.0
        %v1196 = vmax.f32 %v1116, 0.0
        %v1197 = vmax.f32 %v1118, 0.0
        %v1198 = vmax.f32 %v1007, 0.0
        %v1199 = vmax.f32 %v1009, 0.0
        %v1200 = vmax.f32 %v1120, 0.0
        %v1201 = vmax.f32 %v1122, 0.0
        %v1202 = vmax.f32 %v1013, 0.0
        %v1203 = vmax.f32 %v1015, 0.0
        %v1204 = vmax.f32 %v1126, 0.0
        %v1205 = vmax.f32 %v1128, 0.0
        %v1206 = vmax.f32 %v1017, 0.0
        %v1207 = vmax.f32 %v1019, 0.0
        %v1208 = vmax.f32 %v1130, 0.0
        %v1209 = vmax.f32 %v1132, 0.0
        %v1210 = vmax.f32 %v1023, 0.0
        %v1211 = vmax.f32 %v1025, 0.0
        %v1212 = vmax.f32 %v1136, 0.0
        %v1213 = vmax.f32 %v1138, 0.0
        %v1214 = vmax.f32 %v1027, 0.0
        %v1215 = vmax.f32 %v1029, 0.0
        %v1216 = vmax.f32 %v1140, 0.0
        %v1217 = vmax.f32 %v1142, 0.0
        %v1218 = vmax.f32 %v1033, 0.0
        %v1219 = vmax.f32 %v1035, 0.0
        %v1220 = vmax.f32 %v1146, 0.0
        %v1221 = vmax.f32 %v1148, 0.0
        %v1222 = vmax.f32 %v1037, 0.0
        %v1223 = vmax.f32 %v1039, 0.0
        %v1224 = vmax.f32 %v1150, 0.0
        %v1225 = vmax.f32 %v1152, 0.0
        %v1226 = vmax.f32 %v1043, 0.0
        %v1227 = vmax.f32 %v1045, 0.0
        %v1228 = vmax.f32 %v1156, 0.0
        %v1229 = vmax.f32 %v1158, 0.0
        %v1230 = vmax.f32 %v1047, 0.0
        %v1231 = vmax.f32 %v1049, 0.0
        %v1232 = vmax.f32 %v1160, 0.0
        %v1233 = vmax.f32 %v1162, 0.0
        %v1234 = vmax.f32 %v1053, 0.0
        %v1235 = vmax.f32 %v1055, 0.0
        %v1236 = vmax.f32 %v1166, 0.0
        %v1237 = vmax.f32 %v1168, 0.0
        %v1238 = vmax.f32 %v1057, 0.0
        %v1239 = vmax.f32 %v1059, 0.0
        %v1240 = vmax.f32 %v1170, 0.0
        %v1241 = vmax.f32 %v1172, 0.0
        %v1242 = vmax.f32 %v1063, 0.0
        %v1243 = vmax.f32 %v1065, 0.0
        %v1244 = vmax.f32 %v1176, 0.0
        %v1245 = vmax.f32 %v1178, 0.0
        %v1246 = vmax.f32 %v1067, 0.0
        %v1247 = vmax.f32 %v1069, 0.0
        %v1248 = vmax.f32 %v1180, 0.0
        %v1249 = vmax.f32 %v1182, 0.0
        %v1250 = vmax.f32 %v1073, 0.0
        %v1251 = vmax.f32 %v1075, 0.0
        %v1252 = vmax.f32 %v1186, 0.0
        %v1253 = vmax.f32 %v1188, 0.0
        %v1254 = vmax.f32 %v1077, 0.0
        %v1255 = vmax.f32 %v1079, 0.0
        %v1256 = vmax.f32 %v1190, 0.0
        %v1257 = vmax.f32 %v1192, 0.0
        %s1258 = scalar_lea.vmem %s2, 64
        %v1259 = vld [vmem:[%s1258] sm:$0xf]
        %v1260 = vld [vmem:[%s1258 + $0x4] sm:$0xf]
        %v1261 = vld [vmem:[%s1258 + $0x8] sm:$0xf]
        %v1262 = vld [vmem:[%s1258 + $0xc] sm:$0xf]
        %v1263 = vld [vmem:[%s1258 + $0x10] sm:$0xf]
        %v1264 = vld [vmem:[%s1258 + $0x14] sm:$0xf]
        %v1265 = vld [vmem:[%s1258 + $0x18] sm:$0xf]
        %v1266 = vld [vmem:[%s1258 + $0x1c] sm:$0xf]
        %v1267 = vld [vmem:[%s1258 + $0x20] sm:$0xf]
        %v1268 = vld [vmem:[%s1258 + $0x24] sm:$0xf]
        %v1269 = vld [vmem:[%s1258 + $0x28] sm:$0xf]
        %v1270 = vld [vmem:[%s1258 + $0x2c] sm:$0xf]
        %v1271 = vld [vmem:[%s1258 + $0x30] sm:$0xf]
        %v1272 = vld [vmem:[%s1258 + $0x34] sm:$0xf]
        %v1273 = vld [vmem:[%s1258 + $0x38] sm:$0xf]
        %v1274 = vld [vmem:[%s1258 + $0x3c] sm:$0xf]
        %v1275 = vpack.c.bf16 %v1198, %v1194
        %v1276 = vpack.c.bf16 %v1199, %v1195
        %v1277 = vpack.c.bf16 %v1200, %v1196
        %v1278 = vpack.c.bf16 %v1201, %v1197
        %v1279 = vpack.c.bf16 %v1206, %v1202
        %v1280 = vpack.c.bf16 %v1207, %v1203
        %v1281 = vpack.c.bf16 %v1208, %v1204
        %v1282 = vpack.c.bf16 %v1209, %v1205
        %v1283 = vpack.c.bf16 %v1214, %v1210
        %v1284 = vpack.c.bf16 %v1215, %v1211
        %v1285 = vpack.c.bf16 %v1216, %v1212
        %v1286 = vpack.c.bf16 %v1217, %v1213
        %v1287 = vpack.c.bf16 %v1222, %v1218
        %v1288 = vpack.c.bf16 %v1223, %v1219
        %v1289 = vpack.c.bf16 %v1224, %v1220
        %v1290 = vpack.c.bf16 %v1225, %v1221
        %v1291 = vpack.c.bf16 %v1230, %v1226
        %v1292 = vpack.c.bf16 %v1231, %v1227
        %v1293 = vpack.c.bf16 %v1232, %v1228
        %v1294 = vpack.c.bf16 %v1233, %v1229
        %v1295 = vpack.c.bf16 %v1238, %v1234
        %v1296 = vpack.c.bf16 %v1239, %v1235
        %v1297 = vpack.c.bf16 %v1240, %v1236
        %v1298 = vpack.c.bf16 %v1241, %v1237
        %v1299 = vpack.c.bf16 %v1246, %v1242
        %v1300 = vpack.c.bf16 %v1247, %v1243
        %v1301 = vpack.c.bf16 %v1248, %v1244
        %v1302 = vpack.c.bf16 %v1249, %v1245
        %v1303 = vpack.c.bf16 %v1254, %v1250
        %v1304 = vpack.c.bf16 %v1255, %v1251
        %v1305 = vpack.c.bf16 %v1256, %v1252
        %v1306 = vpack.c.bf16 %v1257, %v1253
        %s1307 = scalar_lea.vmem %s4, 256
        %v1308 = vld [vmem:[%s1307] sm:$0xff]
        %v1309 = vld [vmem:[%s1307 + $0x8] sm:$0xff]
        %v1310 = vld [vmem:[%s1307 + $0x10] sm:$0xff]
        %v1311 = vld [vmem:[%s1307 + $0x18] sm:$0xff]
        %v1312 = vld [vmem:[%s1307 + $0x20] sm:$0xff]
        %v1313 = vld [vmem:[%s1307 + $0x28] sm:$0xff]
        %v1314 = vld [vmem:[%s1307 + $0x30] sm:$0xff]
        %v1315 = vld [vmem:[%s1307 + $0x38] sm:$0xff]
        %v1316 = vld [vmem:[%s1307 + $0x40] sm:$0xff]
        %v1317 = vld [vmem:[%s1307 + $0x48] sm:$0xff]
        %v1318 = vld [vmem:[%s1307 + $0x50] sm:$0xff]
        %v1319 = vld [vmem:[%s1307 + $0x58] sm:$0xff]
        %v1320 = vld [vmem:[%s1307 + $0x60] sm:$0xff]
        %v1321 = vld [vmem:[%s1307 + $0x68] sm:$0xff]
        %v1322 = vld [vmem:[%s1307 + $0x70] sm:$0xff]
        %v1323 = vld [vmem:[%s1307 + $0x78] sm:$0xff]
        %1325 = vset.pattern.permute.xlu0 0
        %1326 = vperm.xlu0 %1325, %v1308
        %v1327 = vpop.permute.xlu0 %1326
        %1330 = vset.pattern.permute.xlu0 0
        %1331 = vperm.xlu0 %1330, %v1309
        %v1332 = vpop.permute.xlu0 %1331
        %1335 = vset.pattern.permute.xlu0 0
        %1336 = vperm.xlu0 %1335, %v1310
        %v1337 = vpop.permute.xlu0 %1336
        %1340 = vset.pattern.permute.xlu0 0
        %1341 = vperm.xlu0 %1340, %v1311
        %v1342 = vpop.permute.xlu0 %1341
        %1345 = vset.pattern.permute.xlu0 0
        %1346 = vperm.xlu0 %1345, %v1312
        %v1347 = vpop.permute.xlu0 %1346
        %1350 = vset.pattern.permute.xlu0 0
        %1351 = vperm.xlu0 %1350, %v1313
        %v1352 = vpop.permute.xlu0 %1351
        %1355 = vset.pattern.permute.xlu0 0
        %1356 = vperm.xlu0 %1355, %v1314
        %v1357 = vpop.permute.xlu0 %1356
        %1360 = vset.pattern.permute.xlu0 0
        %1361 = vperm.xlu0 %1360, %v1315
        %v1362 = vpop.permute.xlu0 %1361
        %1365 = vset.pattern.permute.xlu0 0
        %1366 = vperm.xlu0 %1365, %v1316
        %v1367 = vpop.permute.xlu0 %1366
        %1370 = vset.pattern.permute.xlu0 0
        %1371 = vperm.xlu0 %1370, %v1317
        %v1372 = vpop.permute.xlu0 %1371
        %1375 = vset.pattern.permute.xlu0 0
        %1376 = vperm.xlu0 %1375, %v1318
        %v1377 = vpop.permute.xlu0 %1376
        %1380 = vset.pattern.permute.xlu0 0
        %1381 = vperm.xlu0 %1380, %v1319
        %v1382 = vpop.permute.xlu0 %1381
        %1385 = vset.pattern.permute.xlu0 0
        %1386 = vperm.xlu0 %1385, %v1320
        %v1387 = vpop.permute.xlu0 %1386
        %1390 = vset.pattern.permute.xlu0 0
        %1391 = vperm.xlu0 %1390, %v1321
        %v1392 = vpop.permute.xlu0 %1391
        %1395 = vset.pattern.permute.xlu0 0
        %1396 = vperm.xlu0 %1395, %v1322
        %v1397 = vpop.permute.xlu0 %1396
        %1400 = vset.pattern.permute.xlu0 0
        %1401 = vperm.xlu0 %1400, %v1323
        %v1402 = vpop.permute.xlu0 %1401
        %v1420 = vunpack.c.l.b16 %v1259
        %v1421 = vunpack.c.l.b16 %v1260
        %v1422 = vunpack.c.l.b16 %v1261
        %v1423 = vunpack.c.l.b16 %v1262
        %v1424 = vunpack.c.l.b16 %v1263
        %v1425 = vunpack.c.l.b16 %v1264
        %v1426 = vunpack.c.l.b16 %v1265
        %v1427 = vunpack.c.l.b16 %v1266
        %v1428 = vunpack.c.l.b16 %v1267
        %v1429 = vunpack.c.l.b16 %v1268
        %v1430 = vunpack.c.l.b16 %v1269
        %v1431 = vunpack.c.l.b16 %v1270
        %v1432 = vunpack.c.l.b16 %v1271
        %v1433 = vunpack.c.l.b16 %v1272
        %v1434 = vunpack.c.l.b16 %v1273
        %v1435 = vunpack.c.l.b16 %v1274
        %v1436 = vpack.c.b16 %v1421, %v1420
        %v1437 = vpack.c.b16 %v1423, %v1422
        %v1438 = vpack.c.b16 %v1425, %v1424
        %v1439 = vpack.c.b16 %v1427, %v1426
        %v1440 = vpack.c.b16 %v1429, %v1428
        %v1441 = vpack.c.b16 %v1431, %v1430
        %v1442 = vpack.c.b16 %v1433, %v1432
        %v1443 = vpack.c.b16 %v1435, %v1434
        %1452 = vmatprep.subr.bf16.mxu0 %v1276
        %1453 = vmatpush1.bf16.msra.mxu0 %v1275
        %1454 = vmatprep.subr.bf16.mxu0 %v1280
        %1455 = vmatpush1.bf16.msra.mxu0 %v1279
        %1456 = vmatprep.subr.bf16.mxu0 %v1284
        %1457 = vmatpush1.bf16.msra.mxu0 %v1283
        %1458 = vmatprep.subr.bf16.mxu0 %v1288
        %1459 = vmatpush1.bf16.msra.mxu0 %v1287
        %1460 = vmatprep.subr.bf16.mxu0 %v1292
        %1461 = vmatpush1.bf16.msra.mxu0 %v1291
        %1462 = vmatprep.subr.bf16.mxu0 %v1296
        %1463 = vmatpush1.bf16.msra.mxu0 %v1295
        %1464 = vmatprep.subr.bf16.mxu0 %v1300
        %1465 = vmatpush1.bf16.msra.mxu0 %v1299
        %1466 = vmatprep.subr.bf16.mxu0 %v1304
        %1467 = vmatpush1.bf16.msra.mxu0 %v1303
        %1468 = vmatprep.subr.bf16.mxu0 0
        %1469 = vmatpush1.bf16.msra.mxu0 0
        %1470 = vmatprep.subr.bf16.mxu0 0
        %1471 = vmatpush1.bf16.msra.mxu0 0
        %1472 = vmatprep.subr.bf16.mxu0 0
        %1473 = vmatpush1.bf16.msra.mxu0 0
        %1474 = vmatprep.subr.bf16.mxu0 0
        %1475 = vmatpush1.bf16.msra.mxu0 0
        %1476 = vmatprep.subr.bf16.mxu0 0
        %1477 = vmatpush1.bf16.msra.mxu0 0
        %1478 = vmatprep.subr.bf16.mxu0 0
        %1479 = vmatpush1.bf16.msra.mxu0 0
        %1480 = vmatprep.subr.bf16.mxu0 0
        %1481 = vmatpush1.bf16.msra.mxu0 0
        %1482 = vmatprep.subr.bf16.mxu0 0
        %1483 = vmatpush1.bf16.msra.mxu0 0
        %1484 = vmatprep.mubr.bf16.mxu0 0
        %1485 = vmatmul.mubr.bf16.gmra.mrb[0].mxu0 %v1436
        %v1486 = vpop.f32.mrb[0].mxu0
        %v1487 = vadd.f32 %v1327, %v1486
        %v1488 = vpop.f32.mrb[0].mxu0
        %v1489 = vadd.f32 %v1327, %v1488
        %v1490 = vpop.f32.mrb[0].mxu0
        %v1491 = vadd.f32 %v1332, %v1490
        %v1492 = vpop.f32.mrb[0].mxu0
        %v1493 = vadd.f32 %v1332, %v1492
        %1494 = vmatprep.mubr.bf16.mxu0 0
        %1495 = vmatmul.mubr.bf16.gmra.mrb[0].mxu0 %v1437
        %v1496 = vpop.f32.mrb[0].mxu0
        %v1497 = vadd.f32 %v1337, %v1496
        %v1498 = vpop.f32.mrb[0].mxu0
        %v1499 = vadd.f32 %v1337, %v1498
        %v1500 = vpop.f32.mrb[0].mxu0
        %v1501 = vadd.f32 %v1342, %v1500
        %v1502 = vpop.f32.mrb[0].mxu0
        %v1503 = vadd.f32 %v1342, %v1502
        %1504 = vmatprep.mubr.bf16.mxu0 0
        %1505 = vmatmul.mubr.bf16.gmra.mrb[0].mxu0 %v1438
        %v1506 = vpop.f32.mrb[0].mxu0
        %v1507 = vadd.f32 %v1347, %v1506
        %v1508 = vpop.f32.mrb[0].mxu0
        %v1509 = vadd.f32 %v1347, %v1508
        %v1510 = vpop.f32.mrb[0].mxu0
        %v1511 = vadd.f32 %v1352, %v1510
        %v1512 = vpop.f32.mrb[0].mxu0
        %v1513 = vadd.f32 %v1352, %v1512
        %1514 = vmatprep.mubr.bf16.mxu0 0
        %1515 = vmatmul.mubr.bf16.gmra.mrb[0].mxu0 %v1439
        %v1516 = vpop.f32.mrb[0].mxu0
        %v1517 = vadd.f32 %v1357, %v1516
        %v1518 = vpop.f32.mrb[0].mxu0
        %v1519 = vadd.f32 %v1357, %v1518
        %v1520 = vpop.f32.mrb[0].mxu0
        %v1521 = vadd.f32 %v1362, %v1520
        %v1522 = vpop.f32.mrb[0].mxu0
        %v1523 = vadd.f32 %v1362, %v1522
        %1524 = vmatprep.mubr.bf16.mxu0 0
        %1525 = vmatmul.mubr.bf16.gmra.mrb[0].mxu0 %v1440
        %v1526 = vpop.f32.mrb[0].mxu0
        %v1527 = vadd.f32 %v1367, %v1526
        %v1528 = vpop.f32.mrb[0].mxu0
        %v1529 = vadd.f32 %v1367, %v1528
        %v1530 = vpop.f32.mrb[0].mxu0
        %v1531 = vadd.f32 %v1372, %v1530
        %v1532 = vpop.f32.mrb[0].mxu0
        %v1533 = vadd.f32 %v1372, %v1532
        %1534 = vmatprep.mubr.bf16.mxu0 0
        %1535 = vmatmul.mubr.bf16.gmra.mrb[0].mxu0 %v1441
        %v1536 = vpop.f32.mrb[0].mxu0
        %v1537 = vadd.f32 %v1377, %v1536
        %v1538 = vpop.f32.mrb[0].mxu0
        %v1539 = vadd.f32 %v1377, %v1538
        %v1540 = vpop.f32.mrb[0].mxu0
        %v1541 = vadd.f32 %v1382, %v1540
        %v1542 = vpop.f32.mrb[0].mxu0
        %v1543 = vadd.f32 %v1382, %v1542
        %1544 = vmatprep.mubr.bf16.mxu0 0
        %1545 = vmatmul.mubr.bf16.gmra.mrb[0].mxu0 %v1442
        %v1546 = vpop.f32.mrb[0].mxu0
        %v1547 = vadd.f32 %v1387, %v1546
        %v1548 = vpop.f32.mrb[0].mxu0
        %v1549 = vadd.f32 %v1387, %v1548
        %v1550 = vpop.f32.mrb[0].mxu0
        %v1551 = vadd.f32 %v1392, %v1550
        %v1552 = vpop.f32.mrb[0].mxu0
        %v1553 = vadd.f32 %v1392, %v1552
        %1554 = vmatprep.mubr.bf16.mxu0 0
        %1555 = vmatmul.mubr.bf16.gmra.mrb[0].mxu0 %v1443
        %v1556 = vpop.f32.mrb[0].mxu0
        %v1557 = vadd.f32 %v1397, %v1556
        %v1558 = vpop.f32.mrb[0].mxu0
        %v1559 = vadd.f32 %v1397, %v1558
        %v1560 = vpop.f32.mrb[0].mxu0
        %v1561 = vadd.f32 %v1402, %v1560
        %v1562 = vpop.f32.mrb[0].mxu0
        %v1563 = vadd.f32 %v1402, %v1562
        %1564 = vdwg.mxu0
        %1565 = vmatprep.subr.bf16.mxu0 %v1278
        %1566 = vmatpush1.bf16.msra.mxu0 %v1277
        %1567 = vmatprep.subr.bf16.mxu0 %v1282
        %1568 = vmatpush1.bf16.msra.mxu0 %v1281
        %1569 = vmatprep.subr.bf16.mxu0 %v1286
        %1570 = vmatpush1.bf16.msra.mxu0 %v1285
        %1571 = vmatprep.subr.bf16.mxu0 %v1290
        %1572 = vmatpush1.bf16.msra.mxu0 %v1289
        %1573 = vmatprep.subr.bf16.mxu0 %v1294
        %1574 = vmatpush1.bf16.msra.mxu0 %v1293
        %1575 = vmatprep.subr.bf16.mxu0 %v1298
        %1576 = vmatpush1.bf16.msra.mxu0 %v1297
        %1577 = vmatprep.subr.bf16.mxu0 %v1302
        %1578 = vmatpush1.bf16.msra.mxu0 %v1301
        %1579 = vmatprep.subr.bf16.mxu0 %v1306
        %1580 = vmatpush1.bf16.msra.mxu0 %v1305
        %1581 = vmatprep.subr.bf16.mxu0 0
        %1582 = vmatpush1.bf16.msra.mxu0 0
        %1583 = vmatprep.subr.bf16.mxu0 0
        %1584 = vmatpush1.bf16.msra.mxu0 0
        %1585 = vmatprep.subr.bf16.mxu0 0
        %1586 = vmatpush1.bf16.msra.mxu0 0
        %1587 = vmatprep.subr.bf16.mxu0 0
        %1588 = vmatpush1.bf16.msra.mxu0 0
        %1589 = vmatprep.subr.bf16.mxu0 0
        %1590 = vmatpush1.bf16.msra.mxu0 0
        %1591 = vmatprep.subr.bf16.mxu0 0
        %1592 = vmatpush1.bf16.msra.mxu0 0
        %1593 = vmatprep.subr.bf16.mxu0 0
        %1594 = vmatpush1.bf16.msra.mxu0 0
        %1595 = vmatprep.subr.bf16.mxu0 0
        %1596 = vmatpush1.bf16.msra.mxu0 0
        %1597 = vmatprep.mubr.bf16.mxu0 0
        %1598 = vmatmul.mubr.bf16.gmra.mrb[0].mxu0 %v1436
        %v1599 = vpop.f32.mrb[0].mxu0
        %v1600 = vadd.f32 %v1327, %v1599
        %v1601 = vpop.f32.mrb[0].mxu0
        %v1602 = vadd.f32 %v1327, %v1601
        %v1603 = vpop.f32.mrb[0].mxu0
        %v1604 = vadd.f32 %v1332, %v1603
        %v1605 = vpop.f32.mrb[0].mxu0
        %v1606 = vadd.f32 %v1332, %v1605
        %1607 = vmatprep.mubr.bf16.mxu0 0
        %1608 = vmatmul.mubr.bf16.gmra.mrb[0].mxu0 %v1437
        %v1609 = vpop.f32.mrb[0].mxu0
        %v1610 = vadd.f32 %v1337, %v1609
        %v1611 = vpop.f32.mrb[0].mxu0
        %v1612 = vadd.f32 %v1337, %v1611
        %v1613 = vpop.f32.mrb[0].mxu0
        %v1614 = vadd.f32 %v1342, %v1613
        %v1615 = vpop.f32.mrb[0].mxu0
        %v1616 = vadd.f32 %v1342, %v1615
        %1617 = vmatprep.mubr.bf16.mxu0 0
        %1618 = vmatmul.mubr.bf16.gmra.mrb[0].mxu0 %v1438
        %v1619 = vpop.f32.mrb[0].mxu0
        %v1620 = vadd.f32 %v1347, %v1619
        %v1621 = vpop.f32.mrb[0].mxu0
        %v1622 = vadd.f32 %v1347, %v1621
        %v1623 = vpop.f32.mrb[0].mxu0
        %v1624 = vadd.f32 %v1352, %v1623
        %v1625 = vpop.f32.mrb[0].mxu0
        %v1626 = vadd.f32 %v1352, %v1625
        %1627 = vmatprep.mubr.bf16.mxu0 0
        %1628 = vmatmul.mubr.bf16.gmra.mrb[0].mxu0 %v1439
        %v1629 = vpop.f32.mrb[0].mxu0
        %v1630 = vadd.f32 %v1357, %v1629
        %v1631 = vpop.f32.mrb[0].mxu0
        %v1632 = vadd.f32 %v1357, %v1631
        %v1633 = vpop.f32.mrb[0].mxu0
        %v1634 = vadd.f32 %v1362, %v1633
        %v1635 = vpop.f32.mrb[0].mxu0
        %v1636 = vadd.f32 %v1362, %v1635
        %1637 = vmatprep.mubr.bf16.mxu0 0
        %1638 = vmatmul.mubr.bf16.gmra.mrb[0].mxu0 %v1440
        %v1639 = vpop.f32.mrb[0].mxu0
        %v1640 = vadd.f32 %v1367, %v1639
        %v1641 = vpop.f32.mrb[0].mxu0
        %v1642 = vadd.f32 %v1367, %v1641
        %v1643 = vpop.f32.mrb[0].mxu0
        %v1644 = vadd.f32 %v1372, %v1643
        %v1645 = vpop.f32.mrb[0].mxu0
        %v1646 = vadd.f32 %v1372, %v1645
        %1647 = vmatprep.mubr.bf16.mxu0 0
        %1648 = vmatmul.mubr.bf16.gmra.mrb[0].mxu0 %v1441
        %v1649 = vpop.f32.mrb[0].mxu0
        %v1650 = vadd.f32 %v1377, %v1649
        %v1651 = vpop.f32.mrb[0].mxu0
        %v1652 = vadd.f32 %v1377, %v1651
        %v1653 = vpop.f32.mrb[0].mxu0
        %v1654 = vadd.f32 %v1382, %v1653
        %v1655 = vpop.f32.mrb[0].mxu0
        %v1656 = vadd.f32 %v1382, %v1655
        %1657 = vmatprep.mubr.bf16.mxu0 0
        %1658 = vmatmul.mubr.bf16.gmra.mrb[0].mxu0 %v1442
        %v1659 = vpop.f32.mrb[0].mxu0
        %v1660 = vadd.f32 %v1387, %v1659
        %v1661 = vpop.f32.mrb[0].mxu0
        %v1662 = vadd.f32 %v1387, %v1661
        %v1663 = vpop.f32.mrb[0].mxu0
        %v1664 = vadd.f32 %v1392, %v1663
        %v1665 = vpop.f32.mrb[0].mxu0
        %v1666 = vadd.f32 %v1392, %v1665
        %1667 = vmatprep.mubr.bf16.mxu0 0
        %1668 = vmatmul.mubr.bf16.gmra.mrb[0].mxu0 %v1443
        %v1669 = vpop.f32.mrb[0].mxu0
        %v1670 = vadd.f32 %v1397, %v1669
        %v1671 = vpop.f32.mrb[0].mxu0
        %v1672 = vadd.f32 %v1397, %v1671
        %v1673 = vpop.f32.mrb[0].mxu0
        %v1674 = vadd.f32 %v1402, %v1673
        %v1675 = vpop.f32.mrb[0].mxu0
        %v1676 = vadd.f32 %v1402, %v1675
        %1677 = vdwg.mxu0
        %v1678 = vmax.f32 %v1487, 0.0
        %v1679 = vmax.f32 %v1489, 0.0
        %v1680 = vmax.f32 %v1600, 0.0
        %v1681 = vmax.f32 %v1602, 0.0
        %v1682 = vmax.f32 %v1491, 0.0
        %v1683 = vmax.f32 %v1493, 0.0
        %v1684 = vmax.f32 %v1604, 0.0
        %v1685 = vmax.f32 %v1606, 0.0
        %v1686 = vmax.f32 %v1497, 0.0
        %v1687 = vmax.f32 %v1499, 0.0
        %v1688 = vmax.f32 %v1610, 0.0
        %v1689 = vmax.f32 %v1612, 0.0
        %v1690 = vmax.f32 %v1501, 0.0
        %v1691 = vmax.f32 %v1503, 0.0
        %v1692 = vmax.f32 %v1614, 0.0
        %v1693 = vmax.f32 %v1616, 0.0
        %v1694 = vmax.f32 %v1507, 0.0
        %v1695 = vmax.f32 %v1509, 0.0
        %v1696 = vmax.f32 %v1620, 0.0
        %v1697 = vmax.f32 %v1622, 0.0
        %v1698 = vmax.f32 %v1511, 0.0
        %v1699 = vmax.f32 %v1513, 0.0
        %v1700 = vmax.f32 %v1624, 0.0
        %v1701 = vmax.f32 %v1626, 0.0
        %v1702 = vmax.f32 %v1517, 0.0
        %v1703 = vmax.f32 %v1519, 0.0
        %v1704 = vmax.f32 %v1630, 0.0
        %v1705 = vmax.f32 %v1632, 0.0
        %v1706 = vmax.f32 %v1521, 0.0
        %v1707 = vmax.f32 %v1523, 0.0
        %v1708 = vmax.f32 %v1634, 0.0
        %v1709 = vmax.f32 %v1636, 0.0
        %v1710 = vmax.f32 %v1527, 0.0
        %v1711 = vmax.f32 %v1529, 0.0
        %v1712 = vmax.f32 %v1640, 0.0
        %v1713 = vmax.f32 %v1642, 0.0
        %v1714 = vmax.f32 %v1531, 0.0
        %v1715 = vmax.f32 %v1533, 0.0
        %v1716 = vmax.f32 %v1644, 0.0
        %v1717 = vmax.f32 %v1646, 0.0
        %v1718 = vmax.f32 %v1537, 0.0
        %v1719 = vmax.f32 %v1539, 0.0
        %v1720 = vmax.f32 %v1650, 0.0
        %v1721 = vmax.f32 %v1652, 0.0
        %v1722 = vmax.f32 %v1541, 0.0
        %v1723 = vmax.f32 %v1543, 0.0
        %v1724 = vmax.f32 %v1654, 0.0
        %v1725 = vmax.f32 %v1656, 0.0
        %v1726 = vmax.f32 %v1547, 0.0
        %v1727 = vmax.f32 %v1549, 0.0
        %v1728 = vmax.f32 %v1660, 0.0
        %v1729 = vmax.f32 %v1662, 0.0
        %v1730 = vmax.f32 %v1551, 0.0
        %v1731 = vmax.f32 %v1553, 0.0
        %v1732 = vmax.f32 %v1664, 0.0
        %v1733 = vmax.f32 %v1666, 0.0
        %v1734 = vmax.f32 %v1557, 0.0
        %v1735 = vmax.f32 %v1559, 0.0
        %v1736 = vmax.f32 %v1670, 0.0
        %v1737 = vmax.f32 %v1672, 0.0
        %v1738 = vmax.f32 %v1561, 0.0
        %v1739 = vmax.f32 %v1563, 0.0
        %v1740 = vmax.f32 %v1674, 0.0
        %v1741 = vmax.f32 %v1676, 0.0
        %s1742 = scalar_lea.vmem %s2, 128
        %v1743 = vld [vmem:[%s1742] sm:$0xf]
        %v1744 = vld [vmem:[%s1742 + $0x4] sm:$0xf]
        %v1745 = vld [vmem:[%s1742 + $0x8] sm:$0xf]
        %v1746 = vld [vmem:[%s1742 + $0xc] sm:$0xf]
        %v1747 = vld [vmem:[%s1742 + $0x10] sm:$0xf]
        %v1748 = vld [vmem:[%s1742 + $0x14] sm:$0xf]
        %v1749 = vld [vmem:[%s1742 + $0x18] sm:$0xf]
        %v1750 = vld [vmem:[%s1742 + $0x1c] sm:$0xf]
        %v1751 = vld [vmem:[%s1742 + $0x20] sm:$0xf]
        %v1752 = vld [vmem:[%s1742 + $0x24] sm:$0xf]
        %v1753 = vld [vmem:[%s1742 + $0x28] sm:$0xf]
        %v1754 = vld [vmem:[%s1742 + $0x2c] sm:$0xf]
        %v1755 = vld [vmem:[%s1742 + $0x30] sm:$0xf]
        %v1756 = vld [vmem:[%s1742 + $0x34] sm:$0xf]
        %v1757 = vld [vmem:[%s1742 + $0x38] sm:$0xf]
        %v1758 = vld [vmem:[%s1742 + $0x3c] sm:$0xf]
        %v1759 = vpack.c.bf16 %v1682, %v1678
        %v1760 = vpack.c.bf16 %v1683, %v1679
        %v1761 = vpack.c.bf16 %v1684, %v1680
        %v1762 = vpack.c.bf16 %v1685, %v1681
        %v1763 = vpack.c.bf16 %v1690, %v1686
        %v1764 = vpack.c.bf16 %v1691, %v1687
        %v1765 = vpack.c.bf16 %v1692, %v1688
        %v1766 = vpack.c.bf16 %v1693, %v1689
        %v1767 = vpack.c.bf16 %v1698, %v1694
        %v1768 = vpack.c.bf16 %v1699, %v1695
        %v1769 = vpack.c.bf16 %v1700, %v1696
        %v1770 = vpack.c.bf16 %v1701, %v1697
        %v1771 = vpack.c.bf16 %v1706, %v1702
        %v1772 = vpack.c.bf16 %v1707, %v1703
        %v1773 = vpack.c.bf16 %v1708, %v1704
        %v1774 = vpack.c.bf16 %v1709, %v1705
        %v1775 = vpack.c.bf16 %v1714, %v1710
        %v1776 = vpack.c.bf16 %v1715, %v1711
        %v1777 = vpack.c.bf16 %v1716, %v1712
        %v1778 = vpack.c.bf16 %v1717, %v1713
        %v1779 = vpack.c.bf16 %v1722, %v1718
        %v1780 = vpack.c.bf16 %v1723, %v1719
        %v1781 = vpack.c.bf16 %v1724, %v1720
        %v1782 = vpack.c.bf16 %v1725, %v1721
        %v1783 = vpack.c.bf16 %v1730, %v1726
        %v1784 = vpack.c.bf16 %v1731, %v1727
        %v1785 = vpack.c.bf16 %v1732, %v1728
        %v1786 = vpack.c.bf16 %v1733, %v1729
        %v1787 = vpack.c.bf16 %v1738, %v1734
        %v1788 = vpack.c.bf16 %v1739, %v1735
        %v1789 = vpack.c.bf16 %v1740, %v1736
        %v1790 = vpack.c.bf16 %v1741, %v1737
        %s1791 = scalar_lea.vmem %s4, 384
        %v1792 = vld [vmem:[%s1791] sm:$0xff]
        %v1793 = vld [vmem:[%s1791 + $0x8] sm:$0xff]
        %v1794 = vld [vmem:[%s1791 + $0x10] sm:$0xff]
        %v1795 = vld [vmem:[%s1791 + $0x18] sm:$0xff]
        %v1796 = vld [vmem:[%s1791 + $0x20] sm:$0xff]
        %v1797 = vld [vmem:[%s1791 + $0x28] sm:$0xff]
        %v1798 = vld [vmem:[%s1791 + $0x30] sm:$0xff]
        %v1799 = vld [vmem:[%s1791 + $0x38] sm:$0xff]
        %v1800 = vld [vmem:[%s1791 + $0x40] sm:$0xff]
        %v1801 = vld [vmem:[%s1791 + $0x48] sm:$0xff]
        %v1802 = vld [vmem:[%s1791 + $0x50] sm:$0xff]
        %v1803 = vld [vmem:[%s1791 + $0x58] sm:$0xff]
        %v1804 = vld [vmem:[%s1791 + $0x60] sm:$0xff]
        %v1805 = vld [vmem:[%s1791 + $0x68] sm:$0xff]
        %v1806 = vld [vmem:[%s1791 + $0x70] sm:$0xff]
        %v1807 = vld [vmem:[%s1791 + $0x78] sm:$0xff]
        %1809 = vset.pattern.permute.xlu0 0
        %1810 = vperm.xlu0 %1809, %v1792
        %v1811 = vpop.permute.xlu0 %1810
        %1814 = vset.pattern.permute.xlu0 0
        %1815 = vperm.xlu0 %1814, %v1793
        %v1816 = vpop.permute.xlu0 %1815
        %1819 = vset.pattern.permute.xlu0 0
        %1820 = vperm.xlu0 %1819, %v1794
        %v1821 = vpop.permute.xlu0 %1820
        %1824 = vset.pattern.permute.xlu0 0
        %1825 = vperm.xlu0 %1824, %v1795
        %v1826 = vpop.permute.xlu0 %1825
        %1829 = vset.pattern.permute.xlu0 0
        %1830 = vperm.xlu0 %1829, %v1796
        %v1831 = vpop.permute.xlu0 %1830
        %1834 = vset.pattern.permute.xlu0 0
        %1835 = vperm.xlu0 %1834, %v1797
        %v1836 = vpop.permute.xlu0 %1835
        %1839 = vset.pattern.permute.xlu0 0
        %1840 = vperm.xlu0 %1839, %v1798
        %v1841 = vpop.permute.xlu0 %1840
        %1844 = vset.pattern.permute.xlu0 0
        %1845 = vperm.xlu0 %1844, %v1799
        %v1846 = vpop.permute.xlu0 %1845
        %1849 = vset.pattern.permute.xlu0 0
        %1850 = vperm.xlu0 %1849, %v1800
        %v1851 = vpop.permute.xlu0 %1850
        %1854 = vset.pattern.permute.xlu0 0
        %1855 = vperm.xlu0 %1854, %v1801
        %v1856 = vpop.permute.xlu0 %1855
        %1859 = vset.pattern.permute.xlu0 0
        %1860 = vperm.xlu0 %1859, %v1802
        %v1861 = vpop.permute.xlu0 %1860
        %1864 = vset.pattern.permute.xlu0 0
        %1865 = vperm.xlu0 %1864, %v1803
        %v1866 = vpop.permute.xlu0 %1865
        %1869 = vset.pattern.permute.xlu0 0
        %1870 = vperm.xlu0 %1869, %v1804
        %v1871 = vpop.permute.xlu0 %1870
        %1874 = vset.pattern.permute.xlu0 0
        %1875 = vperm.xlu0 %1874, %v1805
        %v1876 = vpop.permute.xlu0 %1875
        %1879 = vset.pattern.permute.xlu0 0
        %1880 = vperm.xlu0 %1879, %v1806
        %v1881 = vpop.permute.xlu0 %1880
        %1884 = vset.pattern.permute.xlu0 0
        %1885 = vperm.xlu0 %1884, %v1807
        %v1886 = vpop.permute.xlu0 %1885
        %v1904 = vunpack.c.l.b16 %v1743
        %v1905 = vunpack.c.l.b16 %v1744
        %v1906 = vunpack.c.l.b16 %v1745
        %v1907 = vunpack.c.l.b16 %v1746
        %v1908 = vunpack.c.l.b16 %v1747
        %v1909 = vunpack.c.l.b16 %v1748
        %v1910 = vunpack.c.l.b16 %v1749
        %v1911 = vunpack.c.l.b16 %v1750
        %v1912 = vunpack.c.l.b16 %v1751
        %v1913 = vunpack.c.l.b16 %v1752
        %v1914 = vunpack.c.l.b16 %v1753
        %v1915 = vunpack.c.l.b16 %v1754
        %v1916 = vunpack.c.l.b16 %v1755
        %v1917 = vunpack.c.l.b16 %v1756
        %v1918 = vunpack.c.l.b16 %v1757
        %v1919 = vunpack.c.l.b16 %v1758
        %v1920 = vpack.c.b16 %v1905, %v1904
        %v1921 = vpack.c.b16 %v1907, %v1906
        %v1922 = vpack.c.b16 %v1909, %v1908
        %v1923 = vpack.c.b16 %v1911, %v1910
        %v1924 = vpack.c.b16 %v1913, %v1912
        %v1925 = vpack.c.b16 %v1915, %v1914
        %v1926 = vpack.c.b16 %v1917, %v1916
        %v1927 = vpack.c.b16 %v1919, %v1918
        %1936 = vmatprep.subr.bf16.mxu0 %v1760
        %1937 = vmatpush1.bf16.msra.mxu0 %v1759
        %1938 = vmatprep.subr.bf16.mxu0 %v1764
        %1939 = vmatpush1.bf16.msra.mxu0 %v1763
        %1940 = vmatprep.subr.bf16.mxu0 %v1768
        %1941 = vmatpush1.bf16.msra.mxu0 %v1767
        %1942 = vmatprep.subr.bf16.mxu0 %v1772
        %1943 = vmatpush1.bf16.msra.mxu0 %v1771
        %1944 = vmatprep.subr.bf16.mxu0 %v1776
        %1945 = vmatpush1.bf16.msra.mxu0 %v1775
        %1946 = vmatprep.subr.bf16.mxu0 %v1780
        %1947 = vmatpush1.bf16.msra.mxu0 %v1779
        %1948 = vmatprep.subr.bf16.mxu0 %v1784
        %1949 = vmatpush1.bf16.msra.mxu0 %v1783
        %1950 = vmatprep.subr.bf16.mxu0 %v1788
        %1951 = vmatpush1.bf16.msra.mxu0 %v1787
        %1952 = vmatprep.subr.bf16.mxu0 0
        %1953 = vmatpush1.bf16.msra.mxu0 0
        %1954 = vmatprep.subr.bf16.mxu0 0
        %1955 = vmatpush1.bf16.msra.mxu0 0
        %1956 = vmatprep.subr.bf16.mxu0 0
        %1957 = vmatpush1.bf16.msra.mxu0 0
        %1958 = vmatprep.subr.bf16.mxu0 0
        %1959 = vmatpush1.bf16.msra.mxu0 0
        %1960 = vmatprep.subr.bf16.mxu0 0
        %1961 = vmatpush1.bf16.msra.mxu0 0
        %1962 = vmatprep.subr.bf16.mxu0 0
        %1963 = vmatpush1.bf16.msra.mxu0 0
        %1964 = vmatprep.subr.bf16.mxu0 0
        %1965 = vmatpush1.bf16.msra.mxu0 0
        %1966 = vmatprep.subr.bf16.mxu0 0
        %1967 = vmatpush1.bf16.msra.mxu0 0
        %1968 = vmatprep.mubr.bf16.mxu0 0
        %1969 = vmatmul.mubr.bf16.gmra.mrb[0].mxu0 %v1920
        %v1970 = vpop.f32.mrb[0].mxu0
        %v1971 = vadd.f32 %v1811, %v1970
        %v1972 = vpop.f32.mrb[0].mxu0
        %v1973 = vadd.f32 %v1811, %v1972
        %v1974 = vpop.f32.mrb[0].mxu0
        %v1975 = vadd.f32 %v1816, %v1974
        %v1976 = vpop.f32.mrb[0].mxu0
        %v1977 = vadd.f32 %v1816, %v1976
        %1978 = vmatprep.mubr.bf16.mxu0 0
        %1979 = vmatmul.mubr.bf16.gmra.mrb[0].mxu0 %v1921
        %v1980 = vpop.f32.mrb[0].mxu0
        %v1981 = vadd.f32 %v1821, %v1980
        %v1982 = vpop.f32.mrb[0].mxu0
        %v1983 = vadd.f32 %v1821, %v1982
        %v1984 = vpop.f32.mrb[0].mxu0
        %v1985 = vadd.f32 %v1826, %v1984
        %v1986 = vpop.f32.mrb[0].mxu0
        %v1987 = vadd.f32 %v1826, %v1986
        %1988 = vmatprep.mubr.bf16.mxu0 0
        %1989 = vmatmul.mubr.bf16.gmra.mrb[0].mxu0 %v1922
        %v1990 = vpop.f32.mrb[0].mxu0
        %v1991 = vadd.f32 %v1831, %v1990
        %v1992 = vpop.f32.mrb[0].mxu0
        %v1993 = vadd.f32 %v1831, %v1992
        %v1994 = vpop.f32.mrb[0].mxu0
        %v1995 = vadd.f32 %v1836, %v1994
        %v1996 = vpop.f32.mrb[0].mxu0
        %v1997 = vadd.f32 %v1836, %v1996
        %1998 = vmatprep.mubr.bf16.mxu0 0
        %1999 = vmatmul.mubr.bf16.gmra.mrb[0].mxu0 %v1923
        %v2000 = vpop.f32.mrb[0].mxu0
        %v2001 = vadd.f32 %v1841, %v2000
        %v2002 = vpop.f32.mrb[0].mxu0
        %v2003 = vadd.f32 %v1841, %v2002
        %v2004 = vpop.f32.mrb[0].mxu0
        %v2005 = vadd.f32 %v1846, %v2004
        %v2006 = vpop.f32.mrb[0].mxu0
        %v2007 = vadd.f32 %v1846, %v2006
        %2008 = vmatprep.mubr.bf16.mxu0 0
        %2009 = vmatmul.mubr.bf16.gmra.mrb[0].mxu0 %v1924
        %v2010 = vpop.f32.mrb[0].mxu0
        %v2011 = vadd.f32 %v1851, %v2010
        %v2012 = vpop.f32.mrb[0].mxu0
        %v2013 = vadd.f32 %v1851, %v2012
        %v2014 = vpop.f32.mrb[0].mxu0
        %v2015 = vadd.f32 %v1856, %v2014
        %v2016 = vpop.f32.mrb[0].mxu0
        %v2017 = vadd.f32 %v1856, %v2016
        %2018 = vmatprep.mubr.bf16.mxu0 0
        %2019 = vmatmul.mubr.bf16.gmra.mrb[0].mxu0 %v1925
        %v2020 = vpop.f32.mrb[0].mxu0
        %v2021 = vadd.f32 %v1861, %v2020
        %v2022 = vpop.f32.mrb[0].mxu0
        %v2023 = vadd.f32 %v1861, %v2022
        %v2024 = vpop.f32.mrb[0].mxu0
        %v2025 = vadd.f32 %v1866, %v2024
        %v2026 = vpop.f32.mrb[0].mxu0
        %v2027 = vadd.f32 %v1866, %v2026
        %2028 = vmatprep.mubr.bf16.mxu0 0
        %2029 = vmatmul.mubr.bf16.gmra.mrb[0].mxu0 %v1926
        %v2030 = vpop.f32.mrb[0].mxu0
        %v2031 = vadd.f32 %v1871, %v2030
        %v2032 = vpop.f32.mrb[0].mxu0
        %v2033 = vadd.f32 %v1871, %v2032
        %v2034 = vpop.f32.mrb[0].mxu0
        %v2035 = vadd.f32 %v1876, %v2034
        %v2036 = vpop.f32.mrb[0].mxu0
        %v2037 = vadd.f32 %v1876, %v2036
        %2038 = vmatprep.mubr.bf16.mxu0 0
        %2039 = vmatmul.mubr.bf16.gmra.mrb[0].mxu0 %v1927
        %v2040 = vpop.f32.mrb[0].mxu0
        %v2041 = vadd.f32 %v1881, %v2040
        %v2042 = vpop.f32.mrb[0].mxu0
        %v2043 = vadd.f32 %v1881, %v2042
        %v2044 = vpop.f32.mrb[0].mxu0
        %v2045 = vadd.f32 %v1886, %v2044
        %v2046 = vpop.f32.mrb[0].mxu0
        %v2047 = vadd.f32 %v1886, %v2046
        %2048 = vdwg.mxu0
        %2049 = vmatprep.subr.bf16.mxu0 %v1762
        %2050 = vmatpush1.bf16.msra.mxu0 %v1761
        %2051 = vmatprep.subr.bf16.mxu0 %v1766
        %2052 = vmatpush1.bf16.msra.mxu0 %v1765
        %2053 = vmatprep.subr.bf16.mxu0 %v1770
        %2054 = vmatpush1.bf16.msra.mxu0 %v1769
        %2055 = vmatprep.subr.bf16.mxu0 %v1774
        %2056 = vmatpush1.bf16.msra.mxu0 %v1773
        %2057 = vmatprep.subr.bf16.mxu0 %v1778
        %2058 = vmatpush1.bf16.msra.mxu0 %v1777
        %2059 = vmatprep.subr.bf16.mxu0 %v1782
        %2060 = vmatpush1.bf16.msra.mxu0 %v1781
        %2061 = vmatprep.subr.bf16.mxu0 %v1786
        %2062 = vmatpush1.bf16.msra.mxu0 %v1785
        %2063 = vmatprep.subr.bf16.mxu0 %v1790
        %2064 = vmatpush1.bf16.msra.mxu0 %v1789
        %2065 = vmatprep.subr.bf16.mxu0 0
        %2066 = vmatpush1.bf16.msra.mxu0 0
        %2067 = vmatprep.subr.bf16.mxu0 0
        %2068 = vmatpush1.bf16.msra.mxu0 0
        %2069 = vmatprep.subr.bf16.mxu0 0
        %2070 = vmatpush1.bf16.msra.mxu0 0
        %2071 = vmatprep.subr.bf16.mxu0 0
        %2072 = vmatpush1.bf16.msra.mxu0 0
        %2073 = vmatprep.subr.bf16.mxu0 0
        %2074 = vmatpush1.bf16.msra.mxu0 0
        %2075 = vmatprep.subr.bf16.mxu0 0
        %2076 = vmatpush1.bf16.msra.mxu0 0
        %2077 = vmatprep.subr.bf16.mxu0 0
        %2078 = vmatpush1.bf16.msra.mxu0 0
        %2079 = vmatprep.subr.bf16.mxu0 0
        %2080 = vmatpush1.bf16.msra.mxu0 0
        %2081 = vmatprep.mubr.bf16.mxu0 0
        %2082 = vmatmul.mubr.bf16.gmra.mrb[0].mxu0 %v1920
        %v2083 = vpop.f32.mrb[0].mxu0
        %v2084 = vadd.f32 %v1811, %v2083
        %v2085 = vpop.f32.mrb[0].mxu0
        %v2086 = vadd.f32 %v1811, %v2085
        %v2087 = vpop.f32.mrb[0].mxu0
        %v2088 = vadd.f32 %v1816, %v2087
        %v2089 = vpop.f32.mrb[0].mxu0
        %v2090 = vadd.f32 %v1816, %v2089
        %2091 = vmatprep.mubr.bf16.mxu0 0
        %2092 = vmatmul.mubr.bf16.gmra.mrb[0].mxu0 %v1921
        %v2093 = vpop.f32.mrb[0].mxu0
        %v2094 = vadd.f32 %v1821, %v2093
        %v2095 = vpop.f32.mrb[0].mxu0
        %v2096 = vadd.f32 %v1821, %v2095
        %v2097 = vpop.f32.mrb[0].mxu0
        %v2098 = vadd.f32 %v1826, %v2097
        %v2099 = vpop.f32.mrb[0].mxu0
        %v2100 = vadd.f32 %v1826, %v2099
        %2101 = vmatprep.mubr.bf16.mxu0 0
        %2102 = vmatmul.mubr.bf16.gmra.mrb[0].mxu0 %v1922
        %v2103 = vpop.f32.mrb[0].mxu0
        %v2104 = vadd.f32 %v1831, %v2103
        %v2105 = vpop.f32.mrb[0].mxu0
        %v2106 = vadd.f32 %v1831, %v2105
        %v2107 = vpop.f32.mrb[0].mxu0
        %v2108 = vadd.f32 %v1836, %v2107
        %v2109 = vpop.f32.mrb[0].mxu0
        %v2110 = vadd.f32 %v1836, %v2109
        %2111 = vmatprep.mubr.bf16.mxu0 0
        %2112 = vmatmul.mubr.bf16.gmra.mrb[0].mxu0 %v1923
        %v2113 = vpop.f32.mrb[0].mxu0
        %v2114 = vadd.f32 %v1841, %v2113
        %v2115 = vpop.f32.mrb[0].mxu0
        %v2116 = vadd.f32 %v1841, %v2115
        %v2117 = vpop.f32.mrb[0].mxu0
        %v2118 = vadd.f32 %v1846, %v2117
        %v2119 = vpop.f32.mrb[0].mxu0
        %v2120 = vadd.f32 %v1846, %v2119
        %2121 = vmatprep.mubr.bf16.mxu0 0
        %2122 = vmatmul.mubr.bf16.gmra.mrb[0].mxu0 %v1924
        %v2123 = vpop.f32.mrb[0].mxu0
        %v2124 = vadd.f32 %v1851, %v2123
        %v2125 = vpop.f32.mrb[0].mxu0
        %v2126 = vadd.f32 %v1851, %v2125
        %v2127 = vpop.f32.mrb[0].mxu0
        %v2128 = vadd.f32 %v1856, %v2127
        %v2129 = vpop.f32.mrb[0].mxu0
        %v2130 = vadd.f32 %v1856, %v2129
        %2131 = vmatprep.mubr.bf16.mxu0 0
        %2132 = vmatmul.mubr.bf16.gmra.mrb[0].mxu0 %v1925
        %v2133 = vpop.f32.mrb[0].mxu0
        %v2134 = vadd.f32 %v1861, %v2133
        %v2135 = vpop.f32.mrb[0].mxu0
        %v2136 = vadd.f32 %v1861, %v2135
        %v2137 = vpop.f32.mrb[0].mxu0
        %v2138 = vadd.f32 %v1866, %v2137
        %v2139 = vpop.f32.mrb[0].mxu0
        %v2140 = vadd.f32 %v1866, %v2139
        %2141 = vmatprep.mubr.bf16.mxu0 0
        %2142 = vmatmul.mubr.bf16.gmra.mrb[0].mxu0 %v1926
        %v2143 = vpop.f32.mrb[0].mxu0
        %v2144 = vadd.f32 %v1871, %v2143
        %v2145 = vpop.f32.mrb[0].mxu0
        %v2146 = vadd.f32 %v1871, %v2145
        %v2147 = vpop.f32.mrb[0].mxu0
        %v2148 = vadd.f32 %v1876, %v2147
        %v2149 = vpop.f32.mrb[0].mxu0
        %v2150 = vadd.f32 %v1876, %v2149
        %2151 = vmatprep.mubr.bf16.mxu0 0
        %2152 = vmatmul.mubr.bf16.gmra.mrb[0].mxu0 %v1927
        %v2153 = vpop.f32.mrb[0].mxu0
        %v2154 = vadd.f32 %v1881, %v2153
        %v2155 = vpop.f32.mrb[0].mxu0
        %v2156 = vadd.f32 %v1881, %v2155
        %v2157 = vpop.f32.mrb[0].mxu0
        %v2158 = vadd.f32 %v1886, %v2157
        %v2159 = vpop.f32.mrb[0].mxu0
        %v2160 = vadd.f32 %v1886, %v2159
        %2161 = vdwg.mxu0
        %v2162 = vmax.f32 %v1971, 0.0
        %v2163 = vmax.f32 %v1973, 0.0
        %v2164 = vmax.f32 %v2084, 0.0
        %v2165 = vmax.f32 %v2086, 0.0
        %v2166 = vmax.f32 %v1975, 0.0
        %v2167 = vmax.f32 %v1977, 0.0
        %v2168 = vmax.f32 %v2088, 0.0
        %v2169 = vmax.f32 %v2090, 0.0
        %v2170 = vmax.f32 %v1981, 0.0
        %v2171 = vmax.f32 %v1983, 0.0
        %v2172 = vmax.f32 %v2094, 0.0
        %v2173 = vmax.f32 %v2096, 0.0
        %v2174 = vmax.f32 %v1985, 0.0
        %v2175 = vmax.f32 %v1987, 0.0
        %v2176 = vmax.f32 %v2098, 0.0
        %v2177 = vmax.f32 %v2100, 0.0
        %v2178 = vmax.f32 %v1991, 0.0
        %v2179 = vmax.f32 %v1993, 0.0
        %v2180 = vmax.f32 %v2104, 0.0
        %v2181 = vmax.f32 %v2106, 0.0
        %v2182 = vmax.f32 %v1995, 0.0
        %v2183 = vmax.f32 %v1997, 0.0
        %v2184 = vmax.f32 %v2108, 0.0
        %v2185 = vmax.f32 %v2110, 0.0
        %v2186 = vmax.f32 %v2001, 0.0
        %v2187 = vmax.f32 %v2003, 0.0
        %v2188 = vmax.f32 %v2114, 0.0
        %v2189 = vmax.f32 %v2116, 0.0
        %v2190 = vmax.f32 %v2005, 0.0
        %v2191 = vmax.f32 %v2007, 0.0
        %v2192 = vmax.f32 %v2118, 0.0
        %v2193 = vmax.f32 %v2120, 0.0
        %v2194 = vmax.f32 %v2011, 0.0
        %v2195 = vmax.f32 %v2013, 0.0
        %v2196 = vmax.f32 %v2124, 0.0
        %v2197 = vmax.f32 %v2126, 0.0
        %v2198 = vmax.f32 %v2015, 0.0
        %v2199 = vmax.f32 %v2017, 0.0
        %v2200 = vmax.f32 %v2128, 0.0
        %v2201 = vmax.f32 %v2130, 0.0
        %v2202 = vmax.f32 %v2021, 0.0
        %v2203 = vmax.f32 %v2023, 0.0
        %v2204 = vmax.f32 %v2134, 0.0
        %v2205 = vmax.f32 %v2136, 0.0
        %v2206 = vmax.f32 %v2025, 0.0
        %v2207 = vmax.f32 %v2027, 0.0
        %v2208 = vmax.f32 %v2138, 0.0
        %v2209 = vmax.f32 %v2140, 0.0
        %v2210 = vmax.f32 %v2031, 0.0
        %v2211 = vmax.f32 %v2033, 0.0
        %v2212 = vmax.f32 %v2144, 0.0
        %v2213 = vmax.f32 %v2146, 0.0
        %v2214 = vmax.f32 %v2035, 0.0
        %v2215 = vmax.f32 %v2037, 0.0
        %v2216 = vmax.f32 %v2148, 0.0
        %v2217 = vmax.f32 %v2150, 0.0
        %v2218 = vmax.f32 %v2041, 0.0
        %v2219 = vmax.f32 %v2043, 0.0
        %v2220 = vmax.f32 %v2154, 0.0
        %v2221 = vmax.f32 %v2156, 0.0
        %v2222 = vmax.f32 %v2045, 0.0
        %v2223 = vmax.f32 %v2047, 0.0
        %v2224 = vmax.f32 %v2158, 0.0
        %v2225 = vmax.f32 %v2160, 0.0
        %v2226 = vld [vmem:[%s3] sm:$0xf]
        %v2227 = vpack.c.bf16 %v2166, %v2162
        %v2228 = vpack.c.bf16 %v2167, %v2163
        %v2229 = vpack.c.bf16 %v2168, %v2164
        %v2230 = vpack.c.bf16 %v2169, %v2165
        %v2231 = vpack.c.bf16 %v2174, %v2170
        %v2232 = vpack.c.bf16 %v2175, %v2171
        %v2233 = vpack.c.bf16 %v2176, %v2172
        %v2234 = vpack.c.bf16 %v2177, %v2173
        %v2235 = vpack.c.bf16 %v2182, %v2178
        %v2236 = vpack.c.bf16 %v2183, %v2179
        %v2237 = vpack.c.bf16 %v2184, %v2180
        %v2238 = vpack.c.bf16 %v2185, %v2181
        %v2239 = vpack.c.bf16 %v2190, %v2186
        %v2240 = vpack.c.bf16 %v2191, %v2187
        %v2241 = vpack.c.bf16 %v2192, %v2188
        %v2242 = vpack.c.bf16 %v2193, %v2189
        %v2243 = vpack.c.bf16 %v2198, %v2194
        %v2244 = vpack.c.bf16 %v2199, %v2195
        %v2245 = vpack.c.bf16 %v2200, %v2196
        %v2246 = vpack.c.bf16 %v2201, %v2197
        %v2247 = vpack.c.bf16 %v2206, %v2202
        %v2248 = vpack.c.bf16 %v2207, %v2203
        %v2249 = vpack.c.bf16 %v2208, %v2204
        %v2250 = vpack.c.bf16 %v2209, %v2205
        %v2251 = vpack.c.bf16 %v2214, %v2210
        %v2252 = vpack.c.bf16 %v2215, %v2211
        %v2253 = vpack.c.bf16 %v2216, %v2212
        %v2254 = vpack.c.bf16 %v2217, %v2213
        %v2255 = vpack.c.bf16 %v2222, %v2218
        %v2256 = vpack.c.bf16 %v2223, %v2219
        %v2257 = vpack.c.bf16 %v2224, %v2220
        %v2258 = vpack.c.bf16 %v2225, %v2221
        %2259 = vmatprep.subr.bf16.mxu0 %v2228
        %2260 = vmatpush1.bf16.msra.mxu0 %v2227
        %2261 = vmatprep.subr.bf16.mxu0 %v2232
        %2262 = vmatpush1.bf16.msra.mxu0 %v2231
        %2263 = vmatprep.subr.bf16.mxu0 %v2236
        %2264 = vmatpush1.bf16.msra.mxu0 %v2235
        %2265 = vmatprep.subr.bf16.mxu0 %v2240
        %2266 = vmatpush1.bf16.msra.mxu0 %v2239
        %2267 = vmatprep.subr.bf16.mxu0 %v2244
        %2268 = vmatpush1.bf16.msra.mxu0 %v2243
        %2269 = vmatprep.subr.bf16.mxu0 %v2248
        %2270 = vmatpush1.bf16.msra.mxu0 %v2247
        %2271 = vmatprep.subr.bf16.mxu0 %v2252
        %2272 = vmatpush1.bf16.msra.mxu0 %v2251
        %2273 = vmatprep.subr.bf16.mxu0 %v2256
        %2274 = vmatpush1.bf16.msra.mxu0 %v2255
        %2275 = vmatprep.subr.bf16.mxu0 0
        %2276 = vmatpush1.bf16.msra.mxu0 0
        %2277 = vmatprep.subr.bf16.mxu0 0
        %2278 = vmatpush1.bf16.msra.mxu0 0
        %2279 = vmatprep.subr.bf16.mxu0 0
        %2280 = vmatpush1.bf16.msra.mxu0 0
        %2281 = vmatprep.subr.bf16.mxu0 0
        %2282 = vmatpush1.bf16.msra.mxu0 0
        %2283 = vmatprep.subr.bf16.mxu0 0
        %2284 = vmatpush1.bf16.msra.mxu0 0
        %2285 = vmatprep.subr.bf16.mxu0 0
        %2286 = vmatpush1.bf16.msra.mxu0 0
        %2287 = vmatprep.subr.bf16.mxu0 0
        %2288 = vmatpush1.bf16.msra.mxu0 0
        %2289 = vmatprep.subr.bf16.mxu0 0
        %2290 = vmatpush1.bf16.msra.mxu0 0
        %2291 = vmatprep.mubr.bf16.mxu0 0
        %2292 = vmatmul.mubr.bf16.gmra.mrb[0].mxu0 %v2226
        %v2293 = vpop.f32.mrb[0].mxu0
        %v2294 = vadd.f32 0.0, %v2293
        %v2295 = vpop.f32.mrb[0].mxu0
        %v2296 = vadd.f32 0.0, %v2295
        %v2297 = vpop.f32.mrb[0].mxu0
        %v2298 = vpop.f32.mrb[0].mxu0
        %2299 = vdwg.mxu0
        %2300 = vmatprep.subr.bf16.mxu0 %v2230
        %2301 = vmatpush1.bf16.msra.mxu0 %v2229
        %2302 = vmatprep.subr.bf16.mxu0 %v2234
        %2303 = vmatpush1.bf16.msra.mxu0 %v2233
        %2304 = vmatprep.subr.bf16.mxu0 %v2238
        %2305 = vmatpush1.bf16.msra.mxu0 %v2237
        %2306 = vmatprep.subr.bf16.mxu0 %v2242
        %2307 = vmatpush1.bf16.msra.mxu0 %v2241
        %2308 = vmatprep.subr.bf16.mxu0 %v2246
        %2309 = vmatpush1.bf16.msra.mxu0 %v2245
        %2310 = vmatprep.subr.bf16.mxu0 %v2250
        %2311 = vmatpush1.bf16.msra.mxu0 %v2249
        %2312 = vmatprep.subr.bf16.mxu0 %v2254
        %2313 = vmatpush1.bf16.msra.mxu0 %v2253
        %2314 = vmatprep.subr.bf16.mxu0 %v2258
        %2315 = vmatpush1.bf16.msra.mxu0 %v2257
        %2316 = vmatprep.subr.bf16.mxu0 0
        %2317 = vmatpush1.bf16.msra.mxu0 0
        %2318 = vmatprep.subr.bf16.mxu0 0
        %2319 = vmatpush1.bf16.msra.mxu0 0
        %2320 = vmatprep.subr.bf16.mxu0 0
        %2321 = vmatpush1.bf16.msra.mxu0 0
        %2322 = vmatprep.subr.bf16.mxu0 0
        %2323 = vmatpush1.bf16.msra.mxu0 0
        %2324 = vmatprep.subr.bf16.mxu0 0
        %2325 = vmatpush1.bf16.msra.mxu0 0
        %2326 = vmatprep.subr.bf16.mxu0 0
        %2327 = vmatpush1.bf16.msra.mxu0 0
        %2328 = vmatprep.subr.bf16.mxu0 0
        %2329 = vmatpush1.bf16.msra.mxu0 0
        %2330 = vmatprep.subr.bf16.mxu0 0
        %2331 = vmatpush1.bf16.msra.mxu0 0
        %2332 = vmatprep.mubr.bf16.mxu0 0
        %2333 = vmatmul.mubr.bf16.gmra.mrb[0].mxu0 %v2226
        %v2334 = vpop.f32.mrb[0].mxu0
        %v2335 = vadd.f32 0.0, %v2334
        %v2336 = vpop.f32.mrb[0].mxu0
        %v2337 = vadd.f32 0.0, %v2336
        %v2338 = vpop.f32.mrb[0].mxu0
        %v2339 = vpop.f32.mrb[0].mxu0
        %2340 = vdwg.mxu0
        %s2341 = scalar_lea.vmem %s4, 512
        %v2342 = vld [vmem:[%s2341] sm:$0xff]
        %2344 = vset.pattern.permute.xlu0 0
        %2345 = vperm.xlu0 %2344, %v2342
        %v2346 = vpop.permute.xlu0 %2345
        %v2348 = vadd.f32 %v2294, %v2346
        %v2349 = vadd.f32 %v2296, %v2346
        %v2350 = vadd.f32 %v2335, %v2346
        %v2351 = vadd.f32 %v2337, %v2346
        %v2356 = vcombine.low %v2348, %v2349
        %v2357 = vcombine.low %v2350, %v2351
        %v2359 = vunpack.c.l.s4 1966171168
        %v2360 = vunpack.c.0.s8 %v2359
        %v2361 = vlaneseq
        %v2362 = vshrl.u32 %v2361, 7
        %v2363 = vsub.s32 %v2360, %v2362
        %v2364 = vrot.slane %v2356, %v2363
        %v2366 = vunpack.c.l.s4 1966171168
        %v2367 = vunpack.c.0.s8 %v2366
        %v2368 = vlaneseq
        %v2369 = vshrl.u32 %v2368, 7
        %v2370 = vsub.s32 %v2367, %v2369
        %v2371 = vrot.slane %v2357, %v2370
        %v2372 = vcombine.low %v2364, %v2371
        %v2374 = vunpack.c.l.s4 1966171168
        %v2375 = vunpack.c.0.s8 %v2374
        %v2376 = vlaneseq
        %v2377 = vshrl.u32 %v2376, 7
        %v2378 = vsub.s32 %v2375, %v2377
        %v2379 = vrot.slane %v2372, %v2378
        %v2381 = vlaneseq
        %vm2382 = vcmp.ge.s32.totalorder %v2381, 0
        %vm2383 = vcmp.lt.s32.totalorder %v2381, 512
        %vm2384 = vmand %vm2382, %vm2383
        %2385 = vst.msk [vmem:[%s256] sm:$0xf] %vm2384, %v2379
        %s2386 = sand.u32 %s137, 1
        %s2387 = scalar_lea.sflag [#allocation4], %s2386
        %s2388 = sand.u32 %s137, 1
        %s2389 = smul.addr %s2388, 4
        %s2390 = scalar_lea.vmem [#allocation3], %s2389
        // Predicated region
        $region64: #{tpu_custom_call.1} parent=58 // pred_check
          %p2391 = pneg %p147
        $region65: #{tpu_custom_call.1} parent=58 // pred_check_branch
          %2393 = sbr.rel (%p2391) target = $region67
        $region66: #{tpu_custom_call.1} parent=58 // pred_region
          %s2394 = smul.u32 4, %s19
          %s2396 = ssub.s32 64, 64
          %2397 = vsyncadd %s2387, %s2396
          %s2398 = smul.addr %s2394, 16
          %s2399 = scalar_lea.hbm %s5, %s2398
          %s2401 = sshll.u32 %s2390, 4
          %s2402 = int_to_ptr.vmem [resolvable:$true] %s2401
          %2404 = dma.vmem_to_hbm [thread:$0]  %s2402, 64, %s2399, %s2387
        $region67: #{tpu_custom_call.1} parent=58 // pred_fallthru
          _
      $region59: #{tpu_custom_call.1} parent=5 // pred_fallthru
        _
      %p2405 = scmp.le.s32.totalorder 2, %s14
      // Predicated region
      $region68: #{tpu_custom_call.1} parent=5 // pred_check
        %p2406 = pneg %p2405
      $region69: #{tpu_custom_call.1} parent=5 // pred_check_branch
        %2408 = sbr.rel (%p2406) target = $region71
      $region70: #{tpu_custom_call.1} parent=5 // pred_region
        %s2409 = ssub.s32 %s14, 2
        // Predicated region
        $region72: #{tpu_custom_call.1} parent=70 // pred_check
          %p2410 = pneg %p153
        $region73: #{tpu_custom_call.1} parent=70 // pred_check_branch
          %2412 = sbr.rel (%p2410) target = $region75
        $region74: #{tpu_custom_call.1} parent=70 // pred_region
          %s2413 = sand.u32 %s138, 1
          %s2414 = scalar_lea.sflag [#allocation4], %s2413
          %s2415 = sand.u32 %s138, 1
          %s2416 = smul.addr %s2415, 4
          %s2417 = scalar_lea.vmem [#allocation3], %s2416
          %2418 = dma.done %s2414, 64
        $region75: #{tpu_custom_call.1} parent=70 // pred_fallthru
          _
      $region71: #{tpu_custom_call.1} parent=5 // pred_fallthru
        _
    $region6: #{tpu_custom_call.1} parent=1 // loop_footer
      %s18 = sadd.s32 1, %s14
    $region7: #{tpu_custom_call.1} parent=1 // loop_footer_branch
      %13 = sbr.rel target = $region3
    $region8: #{tpu_custom_call.1} parent=1 // loop_exit
      _
    %2419 = vsyncpa [#allocation4], 1
    %s2420 = scalar_lea.sflag [#allocation4], 1
    %2421 = vsyncpa %s2420, 1

</llo_original>
